<compile_context>
chip_gen: v7x
topology: tpu7x:2x2x1
jax: 0.10.0
libtpu: 0.0.40
codegen_flags: <defaults>
</compile_context>

<pallas_src>
import functools

import jax
import jax.numpy as jnp
from jax.experimental import pallas as pl
from jax.experimental.pallas import tpu as pltpu


# ----------------------------- Pallas kernel --------------------------------
def _stack_kernel(num_heads, eps, B_blk, S, approx_softmax,
                  x_hbm,
                  wqkv_ref, bqkv_ref, wo_ref, bo_ref,
                  w1_ref, b1_ref, w2_ref, b2_ref,
                  g1_ref, beta1_ref, g2_ref, beta2_ref,
                  o_ref,
                  in_sem):
    """One grid step == one GraphTransformerLayer applied to one batch block.

    Grid = (NB, L): nb (parallel, batch blocks) x layer (arbitrary, sequential).
    The activation lives in o_ref (its block index is constant across the layer
    axis, so the block stays resident in VMEM and is written back to HBM only
    after the last layer of each batch block).
    """
    nb = pl.program_id(0)
    layer = pl.program_id(1)
    rows = B_blk * S

    # Load this batch block's input rows from HBM into the resident activation
    # buffer exactly once (x is never held in VMEM beyond this).
    @pl.when(layer == 0)
    def _():
        row0 = pl.multiple_of(nb * rows, rows)
        cp = pltpu.make_async_copy(x_hbm.at[pl.ds(row0, rows)], o_ref, in_sem)
        cp.start()
        cp.wait()

    x = o_ref[...]                               # (rows, E), float32
    E = x.shape[-1]
    hd = E // num_heads

    xb = x.astype(jnp.bfloat16)

    # ---- fused QKV projection (one bf16 MXU matmul, f32 accumulation) ----
    # 1/sqrt(hd) is already baked into the Q slice of wqkv / bqkv.
    qkv = jnp.dot(xb, wqkv_ref[0],
                  preferred_element_type=jnp.float32) + bqkv_ref[0]   # (rows, 3E)
    q = qkv[:, :E]
    k = qkv[:, E:2 * E]
    v = qkv[:, 2 * E:]

    # ---- attention: single (head-)batched einsum over the batch block ----
    if num_heads == 1:
        qh = q.reshape(B_blk, S, hd).astype(jnp.bfloat16)
        kh = k.reshape(B_blk, S, hd).astype(jnp.bfloat16)
        vh = v.reshape(B_blk, S, hd).astype(jnp.bfloat16)
        s = jnp.einsum('bsd,btd->bst', qh, kh,
                       preferred_element_type=jnp.float32)            # (B,S,S)
        s = s - jnp.max(s, axis=-1, keepdims=True)
        p = jnp.exp(s)
        denom = jnp.sum(p, axis=-1, keepdims=True)
        p = p * pl.reciprocal(denom, approx=True) if approx_softmax else p / denom
        ctx = jnp.einsum('bst,btd->bsd', p.astype(jnp.bfloat16), vh,
                         preferred_element_type=jnp.float32)          # (B,S,hd)
    else:
        qh = q.reshape(B_blk, S, num_heads, hd).astype(jnp.bfloat16)
        kh = k.reshape(B_blk, S, num_heads, hd).astype(jnp.bfloat16)
        vh = v.reshape(B_blk, S, num_heads, hd).astype(jnp.bfloat16)
        s = jnp.einsum('bshd,bthd->bhst', qh, kh,
                       preferred_element_type=jnp.float32)            # (B,H,S,S)
        s = s - jnp.max(s, axis=-1, keepdims=True)
        p = jnp.exp(s)
        denom = jnp.sum(p, axis=-1, keepdims=True)
        p = p * pl.reciprocal(denom, approx=True) if approx_softmax else p / denom
        ctx = jnp.einsum('bhst,bthd->bshd', p.astype(jnp.bfloat16), vh,
                         preferred_element_type=jnp.float32)          # (B,S,H,hd)

    attn = jnp.dot(ctx.reshape(rows, E).astype(jnp.bfloat16), wo_ref[0],
                   preferred_element_type=jnp.float32) + bo_ref[0]

    # ---- residual + LayerNorm 1 (f32 stats, single-pass variance) ----
    h1 = x + attn
    mu1 = jnp.mean(h1, axis=-1, keepdims=True)
    var1 = jnp.maximum(jnp.mean(h1 * h1, axis=-1, keepdims=True) - mu1 * mu1, 0.0)
    h1 = (h1 - mu1) * jax.lax.rsqrt(var1 + eps) * g1_ref[0] + beta1_ref[0]

    # ---- feed-forward: Linear -> ReLU -> Linear (fused over all rows) ----
    y = jnp.dot(h1.astype(jnp.bfloat16), w1_ref[0],
                preferred_element_type=jnp.float32) + b1_ref[0]
    y = jnp.maximum(y, 0.0)
    y = jnp.dot(y.astype(jnp.bfloat16), w2_ref[0],
                preferred_element_type=jnp.float32) + b2_ref[0]

    # ---- residual + LayerNorm 2 ----
    h2 = h1 + y
    mu2 = jnp.mean(h2, axis=-1, keepdims=True)
    var2 = jnp.maximum(jnp.mean(h2 * h2, axis=-1, keepdims=True) - mu2 * mu2, 0.0)
    o_ref[...] = (h2 - mu2) * jax.lax.rsqrt(var2 + eps) * g2_ref[0] + beta2_ref[0]


# ------------------------------- wrapper -------------------------------------
def graph_transformer_forward(x, params, num_heads=1, eps=1e-5,
                              exact_softmax=False):
    """x: (S, B, E) — same layout PyTorch nn.MultiheadAttention expects."""
    S, B, E = x.shape
    L = params["wqkvT"].shape[0]
    F = params["w1T"].shape[-1]

    # Single relayout for the whole stack: (S, B, E) -> (B*S, E), batch-major.
    xb = jnp.transpose(x, (1, 0, 2)).reshape(B * S, E)

    # Batch-block split: 2 parallel row blocks when divisibility allows
    # (feeds v7x's second TensorCore; also halves per-core live intermediates).
    NB = 2 if (B % 2 == 0 and ((B // 2) * S) % 8 == 0) else 1
    B_blk = B // NB
    rows = B_blk * S

    weights = (params["wqkvT"], params["bqkv"],
               params["woT"], params["bo"],
               params["w1T"], params["b1"], params["w2T"], params["b2"],
               params["g1"], params["beta1"], params["g2"], params["beta2"])

    def wspec(w):  # one layer's slice of a stacked (L, a, b) parameter array
        return pl.BlockSpec((1,) + w.shape[1:], lambda nb, l: (l, 0, 0))

    in_specs = [pl.BlockSpec(memory_space=pl.ANY)]     # x stays in HBM
    in_specs += [wspec(w) for w in weights]

    # Advisory cost estimate (explicit per component):
    #   proj: QKV 6*E*E + out-proj 2*E*E = 8*E*E flops/token
    #   attn: QK^T 2*S*E + PV 2*S*E     = 4*S*E flops/token
    #   FFN : 2*E*F + 2*F*E             = 4*E*F flops/token
    flops = L * B * S * (8 * E * E + 4 * S * E + 4 * E * F)
    transcendentals = L * num_heads * B * S * S + 2 * L * B * S
    bytes_accessed = (2 * xb.size * 4
                      + NB * sum(int(w.size) * w.dtype.itemsize for w in weights))

    # Scoped-VMEM sizing: resident activation + double-buffered per-layer
    # weights + attention / FFN intermediates; clamp to v7x's 64 MiB.
    per_layer_w_bytes = sum((int(w.size) // L) * w.dtype.itemsize for w in weights)
    est = (2 * rows * E * 4
           + 2 * per_layer_w_bytes
           + rows * (3 * E + F + 2 * E) * 4
           + B_blk * num_heads * S * S * 8)
    vmem_limit = int(min(64 * 1024 * 1024, max(32 * 1024 * 1024, 2 * est)))

    kernel = functools.partial(_stack_kernel, num_heads, eps, B_blk, S,
                               not exact_softmax)
    out = pl.pallas_call(
        kernel,
        out_shape=jax.ShapeDtypeStruct((B * S, E), jnp.float32),
        grid_spec=pltpu.PrefetchScalarGridSpec(
            num_scalar_prefetch=0,
            grid=(NB, L),
            in_specs=in_specs,
            out_specs=pl.BlockSpec((rows, E), lambda nb, l: (nb, 0)),
            scratch_shapes=[pltpu.SemaphoreType.DMA],
        ),
        compiler_params=pltpu.CompilerParams(
            # batch blocks are independent (megacore), layers are sequential.
            dimension_semantics=("parallel", "arbitrary"),
            vmem_limit_bytes=vmem_limit),
        cost_estimate=pl.CostEstimate(
            flops=flops,
            transcendentals=transcendentals,
            bytes_accessed=bytes_accessed),
    )(xb, *weights)

    return out.reshape(B, S, E).transpose(1, 0, 2)     # back to (S, B, E)


# --------------------------- parameter construction --------------------------
def init_params(key, n_layers, in_features, out_features, num_heads=1):
    """Layer-stacked, pre-transposed parameters.

    * Q/K/V weights fused into one (E, 3E) matrix per layer; the 1/sqrt(hd)
      attention scale is baked into the Q slice (weights AND bias).
    * Matmul weights stored in bf16 (MXU-native, half the DMA traffic);
      biases / LayerNorm params stay f32.
    """
    E, F = in_features, out_features
    hd = E // num_heads
    scale = 1.0 / (hd ** 0.5)
    acc = {k: [] for k in ("wqkvT", "bqkv", "woT", "bo",
                           "w1T", "b1", "w2T", "b2",
                           "g1", "beta1", "g2", "beta2")}
    s = 0.05
    for i in range(n_layers):
        lk = jax.random.fold_in(key, i)
        ks = jax.random.split(lk, 8)
        in_proj_w = jax.random.normal(ks[0], (3 * E, E), jnp.float32) * s
        in_proj_b = jax.random.normal(ks[1], (3 * E,), jnp.float32) * s
        out_proj_w = jax.random.normal(ks[2], (E, E), jnp.float32) * s
        out_proj_b = jax.random.normal(ks[3], (E,), jnp.float32) * s
        w1 = jax.random.normal(ks[4], (F, E), jnp.float32) * s   # Linear(E -> F)
        b1 = jax.random.normal(ks[5], (F,), jnp.float32) * s
        w2 = jax.random.normal(ks[6], (E, F), jnp.float32) * s   # Linear(F -> E)
        b2 = jax.random.normal(ks[7], (E,), jnp.float32) * s

        wqT = in_proj_w[:E].T * scale            # scale folded into Q projection
        wkT = in_proj_w[E:2 * E].T
        wvT = in_proj_w[2 * E:].T
        bq = in_proj_b[:E] * scale
        bk = in_proj_b[E:2 * E]
        bv = in_proj_b[2 * E:]

        acc["wqkvT"].append(jnp.concatenate([wqT, wkT, wvT], axis=1))   # (E, 3E)
        acc["bqkv"].append(jnp.concatenate([bq, bk, bv])[None, :])      # (1, 3E)
        acc["woT"].append(out_proj_w.T)
        acc["bo"].append(out_proj_b[None, :])
        acc["w1T"].append(w1.T)
        acc["b1"].append(b1[None, :])
        acc["w2T"].append(w2.T)
        acc["b2"].append(b2[None, :])
        acc["g1"].append(jnp.ones((1, E), jnp.float32))
        acc["beta1"].append(jnp.zeros((1, E), jnp.float32))
        acc["g2"].append(jnp.ones((1, E), jnp.float32))
        acc["beta2"].append(jnp.zeros((1, E), jnp.float32))

    bf16_keys = {"wqkvT", "woT", "w1T", "w2T"}
    return {k: jnp.stack(v).astype(jnp.bfloat16 if k in bf16_keys else jnp.float32)
            for k, v in acc.items()}


# ---------------------------------- main -------------------------------------
if __name__ == "__main__":
    n_layers = 2
    in_features = 32      # embed_dim E
    out_features = 64     # feed-forward hidden size F
    num_heads = 1
    S, B = 8, 2           # seq len, batch

    key = jax.random.PRNGKey(0)
    kx, kp = jax.random.split(key)
    x = jax.random.normal(kx, (S, B, in_features), jnp.float32)  # (seq, batch, embed)
    params = init_params(kp, n_layers, in_features, out_features, num_heads=num_heads)

    out = graph_transformer_forward(x, params, num_heads=num_heads)
    out = jax.block_until_ready(out)
    assert out.shape == (S, B, in_features)
    assert bool(jnp.all(jnp.isfinite(out)))
    print("KERNEL_OK")
</pallas_src>

<mosaic_0001>
module attributes {stable_mosaic.version = 11 : i64} {
  func.func @_stack_kernel(%arg0: i32, %arg1: i32, %arg2: memref<16x32xf32, #tpu.memory_space<any>>, %arg3: memref<1x32x96xbf16, #tpu.memory_space<vmem>>, %arg4: memref<1x1x96xf32, #tpu.memory_space<vmem>>, %arg5: memref<1x32x32xbf16, #tpu.memory_space<vmem>>, %arg6: memref<1x1x32xf32, #tpu.memory_space<vmem>>, %arg7: memref<1x32x64xbf16, #tpu.memory_space<vmem>>, %arg8: memref<1x1x64xf32, #tpu.memory_space<vmem>>, %arg9: memref<1x64x32xbf16, #tpu.memory_space<vmem>>, %arg10: memref<1x1x32xf32, #tpu.memory_space<vmem>>, %arg11: memref<1x1x32xf32, #tpu.memory_space<vmem>>, %arg12: memref<1x1x32xf32, #tpu.memory_space<vmem>>, %arg13: memref<1x1x32xf32, #tpu.memory_space<vmem>>, %arg14: memref<1x1x32xf32, #tpu.memory_space<vmem>>, %arg15: memref<8x32xf32, #tpu.memory_space<vmem>>, %arg16: memref<!tpu.dma_semaphore, #tpu.memory_space<semaphore_mem>>) attributes {dimension_semantics = [#tpu.dimension_semantics<parallel>, #tpu.dimension_semantics<arbitrary>], iteration_bounds = array<i64: 2, 2>, scalar_prefetch = 0 : i64, scratch_operands = 1 : i64, tpu.core_type = #tpu.core_type<tc>, window_params = [{}, {transform_indices = @transform_1, window_bounds = array<i64: 1, 32, 96>}, {transform_indices = @transform_2, window_bounds = array<i64: 1, 1, 96>}, {transform_indices = @transform_3, window_bounds = array<i64: 1, 32, 32>}, {transform_indices = @transform_4, window_bounds = array<i64: 1, 1, 32>}, {transform_indices = @transform_5, window_bounds = array<i64: 1, 32, 64>}, {transform_indices = @transform_6, window_bounds = array<i64: 1, 1, 64>}, {transform_indices = @transform_7, window_bounds = array<i64: 1, 64, 32>}, {transform_indices = @transform_8, window_bounds = array<i64: 1, 1, 32>}, {transform_indices = @transform_9, window_bounds = array<i64: 1, 1, 32>}, {transform_indices = @transform_10, window_bounds = array<i64: 1, 1, 32>}, {transform_indices = @transform_11, window_bounds = array<i64: 1, 1, 32>}, {transform_indices = @transform_12, window_bounds = array<i64: 1, 1, 32>}, {transform_indices = @transform_13, window_bounds = array<i64: 8, 32>}]} {
    %c0_i32 = arith.constant 0 : i32
    %0 = arith.cmpi eq, %arg1, %c0_i32 : i32
    %1 = arith.extui %0 : i1 to i32
    %c0_i32_0 = arith.constant 0 : i32
    %2 = arith.cmpi ne, %1, %c0_i32_0 : i32
    scf.if %2 {
      %c8_i32 = arith.constant 8 : i32
      %120 = arith.muli %arg0, %c8_i32 : i32
      %121 = tpu.assume_multiple %120, 8 : i32
      %c0_i32_60 = arith.constant 0 : i32
      %122 = tpu.memref_slice %arg2[%121, %c0_i32_60] : memref<16x32xf32, #tpu.memory_space<any>> -> memref<8x32xf32, #tpu.memory_space<any>>
      tpu.enqueue_dma source(%122 : memref<8x32xf32, #tpu.memory_space<any>>) target(%arg15 : memref<8x32xf32, #tpu.memory_space<vmem>>) target_semaphore(%arg16 : memref<!tpu.dma_semaphore, #tpu.memory_space<semaphore_mem>>)
      %c0_i32_61 = arith.constant 0 : i32
      %123 = tpu.memref_slice %arg2[%121, %c0_i32_61] : memref<16x32xf32, #tpu.memory_space<any>> -> memref<8x32xf32, #tpu.memory_space<any>>
      tpu.wait_dma2 semaphore(%arg16 : memref<!tpu.dma_semaphore, #tpu.memory_space<semaphore_mem>>) src(%123 : memref<8x32xf32, #tpu.memory_space<any>>) dst(%arg15 : memref<8x32xf32, #tpu.memory_space<vmem>>)
    } else {
    }
    %c0 = arith.constant 0 : index
    %c0_1 = arith.constant 0 : index
    %3 = vector.load %arg15[%c0, %c0_1] : memref<8x32xf32, #tpu.memory_space<vmem>>, vector<8x32xf32>
    %4 = arith.truncf %3 : vector<8x32xf32> to vector<8x32xbf16>
    %c0_2 = arith.constant 0 : index
    %c0_3 = arith.constant 0 : index
    %c0_4 = arith.constant 0 : index
    %5 = vector.load %arg3[%c0_2, %c0_3, %c0_4] : memref<1x32x96xbf16, #tpu.memory_space<vmem>>, vector<1x32x96xbf16>
    %6 = vector.shape_cast %5 : vector<1x32x96xbf16> to vector<32x96xbf16>
    %cst = arith.constant dense<0.000000e+00> : vector<8x96xf32>
    %7 = tpu.matmul %4, %6, %cst {dimension_numbers = #tpu.dot_dimension_numbers<[1], [0], [0], [1], [0, 0, 1, 1], [], []>} : vector<8x32xbf16>, vector<32x96xbf16>, vector<8x96xf32> -> vector<8x96xf32>
    %c0_5 = arith.constant 0 : index
    %c0_6 = arith.constant 0 : index
    %c0_7 = arith.constant 0 : index
    %8 = vector.load %arg4[%c0_5, %c0_6, %c0_7] : memref<1x1x96xf32, #tpu.memory_space<vmem>>, vector<1x1x96xf32>
    %9 = vector.shape_cast %8 : vector<1x1x96xf32> to vector<1x96xf32>
    %10 = vector.broadcast %9 : vector<1x96xf32> to vector<8x96xf32>
    %11 = arith.addf %7, %10 : vector<8x96xf32>
    %12 = vector.extract_strided_slice %11 {offsets = [0, 0], sizes = [8, 32], strides = [1, 1]} : vector<8x96xf32> to vector<8x32xf32>
    %13 = vector.extract_strided_slice %11 {offsets = [0, 32], sizes = [8, 32], strides = [1, 1]} : vector<8x96xf32> to vector<8x32xf32>
    %14 = vector.extract_strided_slice %11 {offsets = [0, 64], sizes = [8, 32], strides = [1, 1]} : vector<8x96xf32> to vector<8x32xf32>
    %15 = vector.shape_cast %12 : vector<8x32xf32> to vector<1x8x32xf32>
    %16 = arith.truncf %15 : vector<1x8x32xf32> to vector<1x8x32xbf16>
    %17 = vector.shape_cast %13 : vector<8x32xf32> to vector<1x8x32xf32>
    %18 = arith.truncf %17 : vector<1x8x32xf32> to vector<1x8x32xbf16>
    %19 = vector.shape_cast %14 : vector<8x32xf32> to vector<1x8x32xf32>
    %20 = arith.truncf %19 : vector<1x8x32xf32> to vector<1x8x32xbf16>
    "tpu.trace_start"() <{level = 10 : i32, message = "bsd,btd->bst"}> : () -> ()
    %cst_8 = arith.constant dense<0.000000e+00> : vector<1x8x8xf32>
    %21 = tpu.matmul %16, %18, %cst_8 {dimension_numbers = #tpu.dot_dimension_numbers<[2], [2], [1], [1], [0, 0, 0, 1, 1, 1], [0], [0]>} : vector<1x8x32xbf16>, vector<1x8x32xbf16>, vector<1x8x8xf32> -> vector<1x8x8xf32>
    "tpu.trace_stop"() : () -> ()
    %cst_9 = arith.constant dense<0xFF800000> : vector<1x8xf32>
    %22 = vector.multi_reduction <maximumf>, %21, %cst_9 [2] : vector<1x8x8xf32> to vector<1x8xf32>
    %23 = vector.shape_cast %22 : vector<1x8xf32> to vector<1x8x1xf32>
    %24 = vector.broadcast %23 : vector<1x8x1xf32> to vector<1x8x8xf32>
    %25 = arith.subf %21, %24 : vector<1x8x8xf32>
    %26 = math.exp %25 : vector<1x8x8xf32>
    %cst_10 = arith.constant dense<0.000000e+00> : vector<1x8xf32>
    %27 = vector.multi_reduction <add>, %26, %cst_10 [2] : vector<1x8x8xf32> to vector<1x8xf32>
    %28 = vector.shape_cast %27 : vector<1x8xf32> to vector<1x8x1xf32>
    %29 = tpu.reciprocal %28 {approx = true} : vector<1x8x1xf32> -> vector<1x8x1xf32>
    %30 = vector.broadcast %29 : vector<1x8x1xf32> to vector<1x8x8xf32>
    %31 = arith.mulf %26, %30 : vector<1x8x8xf32>
    %32 = arith.truncf %31 : vector<1x8x8xf32> to vector<1x8x8xbf16>
    "tpu.trace_start"() <{level = 10 : i32, message = "bst,btd->bsd"}> : () -> ()
    %cst_11 = arith.constant dense<0.000000e+00> : vector<1x8x32xf32>
    %33 = tpu.matmul %32, %20, %cst_11 {dimension_numbers = #tpu.dot_dimension_numbers<[2], [1], [1], [2], [0, 0, 0, 1, 1, 2], [0], [0]>} : vector<1x8x8xbf16>, vector<1x8x32xbf16>, vector<1x8x32xf32> -> vector<1x8x32xf32>
    "tpu.trace_stop"() : () -> ()
    %34 = vector.shape_cast %33 : vector<1x8x32xf32> to vector<8x32xf32>
    %35 = arith.truncf %34 : vector<8x32xf32> to vector<8x32xbf16>
    %c0_12 = arith.constant 0 : index
    %c0_13 = arith.constant 0 : index
    %c0_14 = arith.constant 0 : index
    %36 = vector.load %arg5[%c0_12, %c0_13, %c0_14] : memref<1x32x32xbf16, #tpu.memory_space<vmem>>, vector<1x32x32xbf16>
    %37 = vector.shape_cast %36 : vector<1x32x32xbf16> to vector<32x32xbf16>
    %cst_15 = arith.constant dense<0.000000e+00> : vector<8x32xf32>
    %38 = tpu.matmul %35, %37, %cst_15 {dimension_numbers = #tpu.dot_dimension_numbers<[1], [0], [0], [1], [0, 0, 1, 1], [], []>} : vector<8x32xbf16>, vector<32x32xbf16>, vector<8x32xf32> -> vector<8x32xf32>
    %c0_16 = arith.constant 0 : index
    %c0_17 = arith.constant 0 : index
    %c0_18 = arith.constant 0 : index
    %39 = vector.load %arg6[%c0_16, %c0_17, %c0_18] : memref<1x1x32xf32, #tpu.memory_space<vmem>>, vector<1x1x32xf32>
    %40 = vector.shape_cast %39 : vector<1x1x32xf32> to vector<1x32xf32>
    %41 = vector.broadcast %40 : vector<1x32xf32> to vector<8x32xf32>
    %42 = arith.addf %38, %41 : vector<8x32xf32>
    %43 = arith.addf %3, %42 : vector<8x32xf32>
    %cst_19 = arith.constant dense<0.000000e+00> : vector<8xf32>
    %44 = vector.multi_reduction <add>, %43, %cst_19 [1] : vector<8x32xf32> to vector<8xf32>
    %45 = vector.shape_cast %44 : vector<8xf32> to vector<8x1xf32>
    %cst_20 = arith.constant 3.200000e+01 : f32
    %46 = vector.broadcast %cst_20 : f32 to vector<8x1xf32>
    %47 = arith.divf %45, %46 : vector<8x1xf32>
    %48 = arith.mulf %43, %43 : vector<8x32xf32>
    %cst_21 = arith.constant dense<0.000000e+00> : vector<8xf32>
    %49 = vector.multi_reduction <add>, %48, %cst_21 [1] : vector<8x32xf32> to vector<8xf32>
    %50 = vector.shape_cast %49 : vector<8xf32> to vector<8x1xf32>
    %cst_22 = arith.constant 3.200000e+01 : f32
    %51 = vector.broadcast %cst_22 : f32 to vector<8x1xf32>
    %52 = arith.divf %50, %51 : vector<8x1xf32>
    %53 = arith.mulf %47, %47 : vector<8x1xf32>
    %54 = arith.subf %52, %53 : vector<8x1xf32>
    %cst_23 = arith.constant 0.000000e+00 : f32
    %55 = vector.broadcast %cst_23 : f32 to vector<8x1xf32>
    %56 = arith.maximumf %54, %55 : vector<8x1xf32>
    %57 = vector.broadcast %47 : vector<8x1xf32> to vector<8x32xf32>
    %58 = arith.subf %43, %57 : vector<8x32xf32>
    %cst_24 = arith.constant 9.99999974E-6 : f32
    %59 = vector.broadcast %cst_24 : f32 to vector<8x1xf32>
    %60 = arith.addf %56, %59 : vector<8x1xf32>
    %61 = math.rsqrt %60 : vector<8x1xf32>
    %62 = vector.broadcast %61 : vector<8x1xf32> to vector<8x32xf32>
    %63 = arith.mulf %58, %62 : vector<8x32xf32>
    %c0_25 = arith.constant 0 : index
    %c0_26 = arith.constant 0 : index
    %c0_27 = arith.constant 0 : index
    %64 = vector.load %arg11[%c0_25, %c0_26, %c0_27] : memref<1x1x32xf32, #tpu.memory_space<vmem>>, vector<1x1x32xf32>
    %65 = vector.shape_cast %64 : vector<1x1x32xf32> to vector<1x32xf32>
    %66 = vector.broadcast %65 : vector<1x32xf32> to vector<8x32xf32>
    %67 = arith.mulf %63, %66 : vector<8x32xf32>
    %c0_28 = arith.constant 0 : index
    %c0_29 = arith.constant 0 : index
    %c0_30 = arith.constant 0 : index
    %68 = vector.load %arg12[%c0_28, %c0_29, %c0_30] : memref<1x1x32xf32, #tpu.memory_space<vmem>>, vector<1x1x32xf32>
    %69 = vector.shape_cast %68 : vector<1x1x32xf32> to vector<1x32xf32>
    %70 = vector.broadcast %69 : vector<1x32xf32> to vector<8x32xf32>
    %71 = arith.addf %67, %70 : vector<8x32xf32>
    %72 = arith.truncf %71 : vector<8x32xf32> to vector<8x32xbf16>
    %c0_31 = arith.constant 0 : index
    %c0_32 = arith.constant 0 : index
    %c0_33 = arith.constant 0 : index
    %73 = vector.load %arg7[%c0_31, %c0_32, %c0_33] : memref<1x32x64xbf16, #tpu.memory_space<vmem>>, vector<1x32x64xbf16>
    %74 = vector.shape_cast %73 : vector<1x32x64xbf16> to vector<32x64xbf16>
    %cst_34 = arith.constant dense<0.000000e+00> : vector<8x64xf32>
    %75 = tpu.matmul %72, %74, %cst_34 {dimension_numbers = #tpu.dot_dimension_numbers<[1], [0], [0], [1], [0, 0, 1, 1], [], []>} : vector<8x32xbf16>, vector<32x64xbf16>, vector<8x64xf32> -> vector<8x64xf32>
    %c0_35 = arith.constant 0 : index
    %c0_36 = arith.constant 0 : index
    %c0_37 = arith.constant 0 : index
    %76 = vector.load %arg8[%c0_35, %c0_36, %c0_37] : memref<1x1x64xf32, #tpu.memory_space<vmem>>, vector<1x1x64xf32>
    %77 = vector.shape_cast %76 : vector<1x1x64xf32> to vector<1x64xf32>
    %78 = vector.broadcast %77 : vector<1x64xf32> to vector<8x64xf32>
    %79 = arith.addf %75, %78 : vector<8x64xf32>
    %cst_38 = arith.constant 0.000000e+00 : f32
    %80 = vector.broadcast %cst_38 : f32 to vector<8x64xf32>
    %81 = arith.maximumf %79, %80 : vector<8x64xf32>
    %82 = arith.truncf %81 : vector<8x64xf32> to vector<8x64xbf16>
    %c0_39 = arith.constant 0 : index
    %c0_40 = arith.constant 0 : index
    %c0_41 = arith.constant 0 : index
    %83 = vector.load %arg9[%c0_39, %c0_40, %c0_41] : memref<1x64x32xbf16, #tpu.memory_space<vmem>>, vector<1x64x32xbf16>
    %84 = vector.shape_cast %83 : vector<1x64x32xbf16> to vector<64x32xbf16>
    %cst_42 = arith.constant dense<0.000000e+00> : vector<8x32xf32>
    %85 = tpu.matmul %82, %84, %cst_42 {dimension_numbers = #tpu.dot_dimension_numbers<[1], [0], [0], [1], [0, 0, 1, 1], [], []>} : vector<8x64xbf16>, vector<64x32xbf16>, vector<8x32xf32> -> vector<8x32xf32>
    %c0_43 = arith.constant 0 : index
    %c0_44 = arith.constant 0 : index
    %c0_45 = arith.constant 0 : index
    %86 = vector.load %arg10[%c0_43, %c0_44, %c0_45] : memref<1x1x32xf32, #tpu.memory_space<vmem>>, vector<1x1x32xf32>
    %87 = vector.shape_cast %86 : vector<1x1x32xf32> to vector<1x32xf32>
    %88 = vector.broadcast %87 : vector<1x32xf32> to vector<8x32xf32>
    %89 = arith.addf %85, %88 : vector<8x32xf32>
    %90 = arith.addf %71, %89 : vector<8x32xf32>
    %cst_46 = arith.constant dense<0.000000e+00> : vector<8xf32>
    %91 = vector.multi_reduction <add>, %90, %cst_46 [1] : vector<8x32xf32> to vector<8xf32>
    %92 = vector.shape_cast %91 : vector<8xf32> to vector<8x1xf32>
    %cst_47 = arith.constant 3.200000e+01 : f32
    %93 = vector.broadcast %cst_47 : f32 to vector<8x1xf32>
    %94 = arith.divf %92, %93 : vector<8x1xf32>
    %95 = arith.mulf %90, %90 : vector<8x32xf32>
    %cst_48 = arith.constant dense<0.000000e+00> : vector<8xf32>
    %96 = vector.multi_reduction <add>, %95, %cst_48 [1] : vector<8x32xf32> to vector<8xf32>
    %97 = vector.shape_cast %96 : vector<8xf32> to vector<8x1xf32>
    %cst_49 = arith.constant 3.200000e+01 : f32
    %98 = vector.broadcast %cst_49 : f32 to vector<8x1xf32>
    %99 = arith.divf %97, %98 : vector<8x1xf32>
    %100 = arith.mulf %94, %94 : vector<8x1xf32>
    %101 = arith.subf %99, %100 : vector<8x1xf32>
    %cst_50 = arith.constant 0.000000e+00 : f32
    %102 = vector.broadcast %cst_50 : f32 to vector<8x1xf32>
    %103 = arith.maximumf %101, %102 : vector<8x1xf32>
    %104 = vector.broadcast %94 : vector<8x1xf32> to vector<8x32xf32>
    %105 = arith.subf %90, %104 : vector<8x32xf32>
    %cst_51 = arith.constant 9.99999974E-6 : f32
    %106 = vector.broadcast %cst_51 : f32 to vector<8x1xf32>
    %107 = arith.addf %103, %106 : vector<8x1xf32>
    %108 = math.rsqrt %107 : vector<8x1xf32>
    %109 = vector.broadcast %108 : vector<8x1xf32> to vector<8x32xf32>
    %110 = arith.mulf %105, %109 : vector<8x32xf32>
    %c0_52 = arith.constant 0 : index
    %c0_53 = arith.constant 0 : index
    %c0_54 = arith.constant 0 : index
    %111 = vector.load %arg13[%c0_52, %c0_53, %c0_54] : memref<1x1x32xf32, #tpu.memory_space<vmem>>, vector<1x1x32xf32>
    %112 = vector.shape_cast %111 : vector<1x1x32xf32> to vector<1x32xf32>
    %113 = vector.broadcast %112 : vector<1x32xf32> to vector<8x32xf32>
    %114 = arith.mulf %110, %113 : vector<8x32xf32>
    %c0_55 = arith.constant 0 : index
    %c0_56 = arith.constant 0 : index
    %c0_57 = arith.constant 0 : index
    %115 = vector.load %arg14[%c0_55, %c0_56, %c0_57] : memref<1x1x32xf32, #tpu.memory_space<vmem>>, vector<1x1x32xf32>
    %116 = vector.shape_cast %115 : vector<1x1x32xf32> to vector<1x32xf32>
    %117 = vector.broadcast %116 : vector<1x32xf32> to vector<8x32xf32>
    %118 = arith.addf %114, %117 : vector<8x32xf32>
    %c0_58 = arith.constant 0 : index
    %c0_59 = arith.constant 0 : index
    %119 = vector.load %arg15[%c0_58, %c0_59] : memref<8x32xf32, #tpu.memory_space<vmem>>, vector<8x32xf32>
    tpu.vector_store %arg15[%c0_58, %c0_59], %118 {strides = array<i32>} : memref<8x32xf32, #tpu.memory_space<vmem>>, vector<8x32xf32>,
    return
  }
  func.func @transform_1(%arg0: i32, %arg1: i32) -> (i32, i32, i32) {
    %c0_i32 = arith.constant 0 : i32
    %c0_i32_0 = arith.constant 0 : i32
    %c0_i32_1 = arith.constant 0 : i32
    return %arg1, %c0_i32, %c0_i32_0 : i32, i32, i32
  }
  func.func @transform_2(%arg0: i32, %arg1: i32) -> (i32, i32, i32) {
    %c0_i32 = arith.constant 0 : i32
    %c0_i32_0 = arith.constant 0 : i32
    %c0_i32_1 = arith.constant 0 : i32
    return %arg1, %c0_i32, %c0_i32_0 : i32, i32, i32
  }
  func.func @transform_3(%arg0: i32, %arg1: i32) -> (i32, i32, i32) {
    %c0_i32 = arith.constant 0 : i32
    %c0_i32_0 = arith.constant 0 : i32
    %c0_i32_1 = arith.constant 0 : i32
    return %arg1, %c0_i32, %c0_i32_0 : i32, i32, i32
  }
  func.func @transform_4(%arg0: i32, %arg1: i32) -> (i32, i32, i32) {
    %c0_i32 = arith.constant 0 : i32
    %c0_i32_0 = arith.constant 0 : i32
    %c0_i32_1 = arith.constant 0 : i32
    return %arg1, %c0_i32, %c0_i32_0 : i32, i32, i32
  }
  func.func @transform_5(%arg0: i32, %arg1: i32) -> (i32, i32, i32) {
    %c0_i32 = arith.constant 0 : i32
    %c0_i32_0 = arith.constant 0 : i32
    %c0_i32_1 = arith.constant 0 : i32
    return %arg1, %c0_i32, %c0_i32_0 : i32, i32, i32
  }
  func.func @transform_6(%arg0: i32, %arg1: i32) -> (i32, i32, i32) {
    %c0_i32 = arith.constant 0 : i32
    %c0_i32_0 = arith.constant 0 : i32
    %c0_i32_1 = arith.constant 0 : i32
    return %arg1, %c0_i32, %c0_i32_0 : i32, i32, i32
  }
  func.func @transform_7(%arg0: i32, %arg1: i32) -> (i32, i32, i32) {
    %c0_i32 = arith.constant 0 : i32
    %c0_i32_0 = arith.constant 0 : i32
    %c0_i32_1 = arith.constant 0 : i32
    return %arg1, %c0_i32, %c0_i32_0 : i32, i32, i32
  }
  func.func @transform_8(%arg0: i32, %arg1: i32) -> (i32, i32, i32) {
    %c0_i32 = arith.constant 0 : i32
    %c0_i32_0 = arith.constant 0 : i32
    %c0_i32_1 = arith.constant 0 : i32
    return %arg1, %c0_i32, %c0_i32_0 : i32, i32, i32
  }
  func.func @transform_9(%arg0: i32, %arg1: i32) -> (i32, i32, i32) {
    %c0_i32 = arith.constant 0 : i32
    %c0_i32_0 = arith.constant 0 : i32
    %c0_i32_1 = arith.constant 0 : i32
    return %arg1, %c0_i32, %c0_i32_0 : i32, i32, i32
  }
  func.func @transform_10(%arg0: i32, %arg1: i32) -> (i32, i32, i32) {
    %c0_i32 = arith.constant 0 : i32
    %c0_i32_0 = arith.constant 0 : i32
    %c0_i32_1 = arith.constant 0 : i32
    return %arg1, %c0_i32, %c0_i32_0 : i32, i32, i32
  }
  func.func @transform_11(%arg0: i32, %arg1: i32) -> (i32, i32, i32) {
    %c0_i32 = arith.constant 0 : i32
    %c0_i32_0 = arith.constant 0 : i32
    %c0_i32_1 = arith.constant 0 : i32
    return %arg1, %c0_i32, %c0_i32_0 : i32, i32, i32
  }
  func.func @transform_12(%arg0: i32, %arg1: i32) -> (i32, i32, i32) {
    %c0_i32 = arith.constant 0 : i32
    %c0_i32_0 = arith.constant 0 : i32
    %c0_i32_1 = arith.constant 0 : i32
    return %arg1, %c0_i32, %c0_i32_0 : i32, i32, i32
  }
  func.func @transform_13(%arg0: i32, %arg1: i32) -> (i32, i32) {
    %c0_i32 = arith.constant 0 : i32
    %c0_i32_0 = arith.constant 0 : i32
    return %arg0, %c0_i32 : i32, i32
  }
}

</mosaic_0001>

<llo_original>
// kernel: tpu_custom_call.1
$region0: #{tpu_custom_call.1}
  #allocation0 [shape = 'u32[]', space=smem, size = 0x4, offset = 0x4, fixed_abs, tag = 'smem constant byte address 0x4 - core index']
  #allocation1 [shape = 'u32[144,128]{1,0:T(1,128)}', space=vmem, size = 0x12000, scoped, tag = 'internal scratch']
  #allocation2 [shape = 's32[1]{0}', space=sflag, size = 0x4, scoped, tag = 'scratch operand']
  #allocation5 [shape = 's32[]', space=sflag, size = 0x4, offset = 0, fixed_abs, tag = 'sflag constant byte address 0x0 - dummy sync flag']
  #allocation6 [shape = 's32[]', space=sflag, size = 0x4, offset = 0, fixed_abs, tag = 'sflag constant byte address 0x0 - dummy sync flag']
  #allocation7 [shape = 'u32[]', space=smem, size = 0x4, offset = 0x44, fixed_abs, tag = 'smem constant byte address 0x44 - assertion arg 0']
  #allocation8 [shape = 'u32[]', space=smem, size = 0x4, offset = 0x48, fixed_abs, tag = 'smem constant byte address 0x48 - assertion arg 1']
  %s0 = inlined_call_operand.hbm [shape: f32[16,32], index: 0, kind: input, shape index: {}]
  %s1 = inlined_call_operand.vmem [shape: bf16[2,32,96], index: 1, kind: input, shape index: {}]
  %s2 = inlined_call_operand.vmem [shape: f32[2,1,96], index: 2, kind: input, shape index: {}]
  %s3 = inlined_call_operand.vmem [shape: bf16[2,32,32], index: 3, kind: input, shape index: {}]
  %s4 = inlined_call_operand.vmem [shape: f32[2,1,32], index: 4, kind: input, shape index: {}]
  %s5 = inlined_call_operand.vmem [shape: bf16[2,32,64], index: 5, kind: input, shape index: {}]
  %s6 = inlined_call_operand.vmem [shape: f32[2,1,64], index: 6, kind: input, shape index: {}]
  %s7 = inlined_call_operand.vmem [shape: bf16[2,64,32], index: 7, kind: input, shape index: {}]
  %s8 = inlined_call_operand.vmem [shape: f32[2,1,32], index: 8, kind: input, shape index: {}]
  %s9 = inlined_call_operand.vmem [shape: f32[2,1,32], index: 9, kind: input, shape index: {}]
  %s10 = inlined_call_operand.vmem [shape: f32[2,1,32], index: 10, kind: input, shape index: {}]
  %s11 = inlined_call_operand.vmem [shape: f32[2,1,32], index: 11, kind: input, shape index: {}]
  %s12 = inlined_call_operand.vmem [shape: f32[2,1,32], index: 12, kind: input, shape index: {}]
  %s13 = inlined_call_operand.hbm [shape: f32[16,32], index: 13, kind: output, shape index: {}]
  %s14 = sld [smem:[#allocation0]]
  $region89: #{tpu_custom_call.1} parent=0
    _
  %s16 = ssub.s32 1, %s14
  %s17 = scalar_select 0, %s16, %s14
  $region1: #{tpu_custom_call.1} parent=0
    #allocation3 [shape = 'u8[8192]{0}', space=vmem, size = 0x2000, scoped, tag = 'output window, operand 0']
    #allocation4 [shape = 's32[2]{0}', space=sflag, size = 0x8, scoped, tag = 'scoped memory for tpu_custom_call.1']
    %18 = vsyncpa [#allocation4], 0
    %s19 = scalar_lea.sflag [#allocation4], 1
    %20 = vsyncpa %s19, 0
    loop: start=0, step=1, limit=6
    $region2: #{tpu_custom_call.1} parent=1 // loop_pre_header
      _
    $region3: #{tpu_custom_call.1} parent=1 // loop_header
      %s22 = sphi 0, %s26
      %p23 = scmp.ge.s32.totalorder %s22, 6
      %s29 = sphi 0, %s41
      %s30 = sphi 0, %s37
      %s31 = sphi 0, %s29
      %s32 = sphi 0, %s30
      %s33 = sphi 0, %s31
      %s34 = sphi 0, %s32
      %s44 = sphi 0, %s46
      %s47 = sphi 0, %s44
      %s48 = sphi 0, %s47
      %s64 = sphi 0, %s48
      %s70 = sphi 0, %s72
      %s73 = sphi 0, %s70
      %s74 = sphi 0, %s73
      %s90 = sphi 0, %s74
      %s96 = sphi 0, %s98
      %s99 = sphi 0, %s96
      %s100 = sphi 0, %s99
      %s116 = sphi 0, %s100
      %s122 = sphi 0, %s124
      %s125 = sphi 0, %s122
      %s126 = sphi 0, %s125
      %s142 = sphi 0, %s126
      %s148 = sphi 0, %s150
      %s151 = sphi 0, %s148
      %s152 = sphi 0, %s151
      %s168 = sphi 0, %s152
      %s174 = sphi 0, %s176
      %s177 = sphi 0, %s174
      %s178 = sphi 0, %s177
      %s194 = sphi 0, %s178
      %s200 = sphi 0, %s202
      %s203 = sphi 0, %s200
      %s204 = sphi 0, %s203
      %s220 = sphi 0, %s204
      %s226 = sphi 0, %s228
      %s229 = sphi 0, %s226
      %s230 = sphi 0, %s229
      %s246 = sphi 0, %s230
      %s252 = sphi 0, %s254
      %s255 = sphi 0, %s252
      %s256 = sphi 0, %s255
      %s272 = sphi 0, %s256
      %s278 = sphi 0, %s280
      %s281 = sphi 0, %s278
      %s282 = sphi 0, %s281
      %s298 = sphi 0, %s282
      %s304 = sphi 0, %s306
      %s307 = sphi 0, %s304
      %s308 = sphi 0, %s307
      %s324 = sphi 0, %s308
      %s330 = sphi 0, %s332
      %s333 = sphi 0, %s330
      %s334 = sphi 0, %s333
      %s350 = sphi 0, %s334
      %s356 = sphi 0, %s358
      %s359 = sphi 0, %s356
      %s360 = sphi 0, %s359
      %s376 = sphi 0, %s360
    $region4: #{tpu_custom_call.1} parent=1 // loop_header_branch
      %25 = sbr.rel (%p23) target = $region8
    $region5: #{tpu_custom_call.1} parent=1 // loop_body
      %s27 = ssub.s32 %s22, 1
      %s28 = ssub.s32 %s22, 2
      %s35 = sadd.s32 1, %s30
      %p36 = scmp.ge.s32.totalorder %s35, 2
      %s37 = scalar_select %p36, 0, %s35
      %s38 = sadd.s32 1, %s29
      %s39 = scalar_select %p36, %s38, %s29
      %p40 = scmp.ge.s32.totalorder %s39, 2
      %s41 = scalar_select %p40, 0, %s39
      %s42 = ssub.s32 %s30, %s37
      %p43 = scmp.eq.s32.totalorder %s42, 0
      %s45 = sadd.s32 %s44, 1
      %s46 = scalar_select %p43, %s44, %s45
      %p49 = pneg %p43
      %p50 = scmp.eq.s32.totalorder %s22, 3
      %p51 = por %p49, %p50
      %p52 = scmp.ne.s32.totalorder %s44, %s47
      %p53 = scmp.eq.s32.totalorder %s22, 0
      %p54 = por %p52, %p53
      %p55 = scmp.ne.s32.totalorder %s44, %s47
      %p56 = scmp.eq.s32.totalorder %s27, 3
      %p57 = por %p55, %p56
      %p58 = scmp.ne.s32.totalorder %s47, %s48
      %p59 = scmp.eq.s32.totalorder %s27, 0
      %p60 = por %p58, %p59
      %p61 = scmp.ne.s32.totalorder %s47, %s48
      %p62 = scmp.eq.s32.totalorder %s28, 3
      %p63 = por %p61, %p62
      %p65 = scmp.ne.s32.totalorder %s48, %s64
      %p66 = scmp.eq.s32.totalorder %s28, 0
      %p67 = por %p65, %p66
      %s68 = ssub.s32 %s30, %s37
      %p69 = scmp.eq.s32.totalorder %s68, 0
      %s71 = sadd.s32 %s70, 1
      %s72 = scalar_select %p69, %s70, %s71
      %p75 = pneg %p69
      %p76 = scmp.eq.s32.totalorder %s22, 3
      %p77 = por %p75, %p76
      %p78 = scmp.ne.s32.totalorder %s70, %s73
      %p79 = scmp.eq.s32.totalorder %s22, 0
      %p80 = por %p78, %p79
      %p81 = scmp.ne.s32.totalorder %s70, %s73
      %p82 = scmp.eq.s32.totalorder %s27, 3
      %p83 = por %p81, %p82
      %p84 = scmp.ne.s32.totalorder %s73, %s74
      %p85 = scmp.eq.s32.totalorder %s27, 0
      %p86 = por %p84, %p85
      %p87 = scmp.ne.s32.totalorder %s73, %s74
      %p88 = scmp.eq.s32.totalorder %s28, 3
      %p89 = por %p87, %p88
      %p91 = scmp.ne.s32.totalorder %s74, %s90
      %p92 = scmp.eq.s32.totalorder %s28, 0
      %p93 = por %p91, %p92
      %s94 = ssub.s32 %s30, %s37
      %p95 = scmp.eq.s32.totalorder %s94, 0
      %s97 = sadd.s32 %s96, 1
      %s98 = scalar_select %p95, %s96, %s97
      %p101 = pneg %p95
      %p102 = scmp.eq.s32.totalorder %s22, 3
      %p103 = por %p101, %p102
      %p104 = scmp.ne.s32.totalorder %s96, %s99
      %p105 = scmp.eq.s32.totalorder %s22, 0
      %p106 = por %p104, %p105
      %p107 = scmp.ne.s32.totalorder %s96, %s99
      %p108 = scmp.eq.s32.totalorder %s27, 3
      %p109 = por %p107, %p108
      %p110 = scmp.ne.s32.totalorder %s99, %s100
      %p111 = scmp.eq.s32.totalorder %s27, 0
      %p112 = por %p110, %p111
      %p113 = scmp.ne.s32.totalorder %s99, %s100
      %p114 = scmp.eq.s32.totalorder %s28, 3
      %p115 = por %p113, %p114
      %p117 = scmp.ne.s32.totalorder %s100, %s116
      %p118 = scmp.eq.s32.totalorder %s28, 0
      %p119 = por %p117, %p118
      %s120 = ssub.s32 %s30, %s37
      %p121 = scmp.eq.s32.totalorder %s120, 0
      %s123 = sadd.s32 %s122, 1
      %s124 = scalar_select %p121, %s122, %s123
      %p127 = pneg %p121
      %p128 = scmp.eq.s32.totalorder %s22, 3
      %p129 = por %p127, %p128
      %p130 = scmp.ne.s32.totalorder %s122, %s125
      %p131 = scmp.eq.s32.totalorder %s22, 0
      %p132 = por %p130, %p131
      %p133 = scmp.ne.s32.totalorder %s122, %s125
      %p134 = scmp.eq.s32.totalorder %s27, 3
      %p135 = por %p133, %p134
      %p136 = scmp.ne.s32.totalorder %s125, %s126
      %p137 = scmp.eq.s32.totalorder %s27, 0
      %p138 = por %p136, %p137
      %p139 = scmp.ne.s32.totalorder %s125, %s126
      %p140 = scmp.eq.s32.totalorder %s28, 3
      %p141 = por %p139, %p140
      %p143 = scmp.ne.s32.totalorder %s126, %s142
      %p144 = scmp.eq.s32.totalorder %s28, 0
      %p145 = por %p143, %p144
      %s146 = ssub.s32 %s30, %s37
      %p147 = scmp.eq.s32.totalorder %s146, 0
      %s149 = sadd.s32 %s148, 1
      %s150 = scalar_select %p147, %s148, %s149
      %p153 = pneg %p147
      %p154 = scmp.eq.s32.totalorder %s22, 3
      %p155 = por %p153, %p154
      %p156 = scmp.ne.s32.totalorder %s148, %s151
      %p157 = scmp.eq.s32.totalorder %s22, 0
      %p158 = por %p156, %p157
      %p159 = scmp.ne.s32.totalorder %s148, %s151
      %p160 = scmp.eq.s32.totalorder %s27, 3
      %p161 = por %p159, %p160
      %p162 = scmp.ne.s32.totalorder %s151, %s152
      %p163 = scmp.eq.s32.totalorder %s27, 0
      %p164 = por %p162, %p163
      %p165 = scmp.ne.s32.totalorder %s151, %s152
      %p166 = scmp.eq.s32.totalorder %s28, 3
      %p167 = por %p165, %p166
      %p169 = scmp.ne.s32.totalorder %s152, %s168
      %p170 = scmp.eq.s32.totalorder %s28, 0
      %p171 = por %p169, %p170
      %s172 = ssub.s32 %s30, %s37
      %p173 = scmp.eq.s32.totalorder %s172, 0
      %s175 = sadd.s32 %s174, 1
      %s176 = scalar_select %p173, %s174, %s175
      %p179 = pneg %p173
      %p180 = scmp.eq.s32.totalorder %s22, 3
      %p181 = por %p179, %p180
      %p182 = scmp.ne.s32.totalorder %s174, %s177
      %p183 = scmp.eq.s32.totalorder %s22, 0
      %p184 = por %p182, %p183
      %p185 = scmp.ne.s32.totalorder %s174, %s177
      %p186 = scmp.eq.s32.totalorder %s27, 3
      %p187 = por %p185, %p186
      %p188 = scmp.ne.s32.totalorder %s177, %s178
      %p189 = scmp.eq.s32.totalorder %s27, 0
      %p190 = por %p188, %p189
      %p191 = scmp.ne.s32.totalorder %s177, %s178
      %p192 = scmp.eq.s32.totalorder %s28, 3
      %p193 = por %p191, %p192
      %p195 = scmp.ne.s32.totalorder %s178, %s194
      %p196 = scmp.eq.s32.totalorder %s28, 0
      %p197 = por %p195, %p196
      %s198 = ssub.s32 %s30, %s37
      %p199 = scmp.eq.s32.totalorder %s198, 0
      %s201 = sadd.s32 %s200, 1
      %s202 = scalar_select %p199, %s200, %s201
      %p205 = pneg %p199
      %p206 = scmp.eq.s32.totalorder %s22, 3
      %p207 = por %p205, %p206
      %p208 = scmp.ne.s32.totalorder %s200, %s203
      %p209 = scmp.eq.s32.totalorder %s22, 0
      %p210 = por %p208, %p209
      %p211 = scmp.ne.s32.totalorder %s200, %s203
      %p212 = scmp.eq.s32.totalorder %s27, 3
      %p213 = por %p211, %p212
      %p214 = scmp.ne.s32.totalorder %s203, %s204
      %p215 = scmp.eq.s32.totalorder %s27, 0
      %p216 = por %p214, %p215
      %p217 = scmp.ne.s32.totalorder %s203, %s204
      %p218 = scmp.eq.s32.totalorder %s28, 3
      %p219 = por %p217, %p218
      %p221 = scmp.ne.s32.totalorder %s204, %s220
      %p222 = scmp.eq.s32.totalorder %s28, 0
      %p223 = por %p221, %p222
      %s224 = ssub.s32 %s30, %s37
      %p225 = scmp.eq.s32.totalorder %s224, 0
      %s227 = sadd.s32 %s226, 1
      %s228 = scalar_select %p225, %s226, %s227
      %p231 = pneg %p225
      %p232 = scmp.eq.s32.totalorder %s22, 3
      %p233 = por %p231, %p232
      %p234 = scmp.ne.s32.totalorder %s226, %s229
      %p235 = scmp.eq.s32.totalorder %s22, 0
      %p236 = por %p234, %p235
      %p237 = scmp.ne.s32.totalorder %s226, %s229
      %p238 = scmp.eq.s32.totalorder %s27, 3
      %p239 = por %p237, %p238
      %p240 = scmp.ne.s32.totalorder %s229, %s230
      %p241 = scmp.eq.s32.totalorder %s27, 0
      %p242 = por %p240, %p241
      %p243 = scmp.ne.s32.totalorder %s229, %s230
      %p244 = scmp.eq.s32.totalorder %s28, 3
      %p245 = por %p243, %p244
      %p247 = scmp.ne.s32.totalorder %s230, %s246
      %p248 = scmp.eq.s32.totalorder %s28, 0
      %p249 = por %p247, %p248
      %s250 = ssub.s32 %s30, %s37
      %p251 = scmp.eq.s32.totalorder %s250, 0
      %s253 = sadd.s32 %s252, 1
      %s254 = scalar_select %p251, %s252, %s253
      %p257 = pneg %p251
      %p258 = scmp.eq.s32.totalorder %s22, 3
      %p259 = por %p257, %p258
      %p260 = scmp.ne.s32.totalorder %s252, %s255
      %p261 = scmp.eq.s32.totalorder %s22, 0
      %p262 = por %p260, %p261
      %p263 = scmp.ne.s32.totalorder %s252, %s255
      %p264 = scmp.eq.s32.totalorder %s27, 3
      %p265 = por %p263, %p264
      %p266 = scmp.ne.s32.totalorder %s255, %s256
      %p267 = scmp.eq.s32.totalorder %s27, 0
      %p268 = por %p266, %p267
      %p269 = scmp.ne.s32.totalorder %s255, %s256
      %p270 = scmp.eq.s32.totalorder %s28, 3
      %p271 = por %p269, %p270
      %p273 = scmp.ne.s32.totalorder %s256, %s272
      %p274 = scmp.eq.s32.totalorder %s28, 0
      %p275 = por %p273, %p274
      %s276 = ssub.s32 %s30, %s37
      %p277 = scmp.eq.s32.totalorder %s276, 0
      %s279 = sadd.s32 %s278, 1
      %s280 = scalar_select %p277, %s278, %s279
      %p283 = pneg %p277
      %p284 = scmp.eq.s32.totalorder %s22, 3
      %p285 = por %p283, %p284
      %p286 = scmp.ne.s32.totalorder %s278, %s281
      %p287 = scmp.eq.s32.totalorder %s22, 0
      %p288 = por %p286, %p287
      %p289 = scmp.ne.s32.totalorder %s278, %s281
      %p290 = scmp.eq.s32.totalorder %s27, 3
      %p291 = por %p289, %p290
      %p292 = scmp.ne.s32.totalorder %s281, %s282
      %p293 = scmp.eq.s32.totalorder %s27, 0
      %p294 = por %p292, %p293
      %p295 = scmp.ne.s32.totalorder %s281, %s282
      %p296 = scmp.eq.s32.totalorder %s28, 3
      %p297 = por %p295, %p296
      %p299 = scmp.ne.s32.totalorder %s282, %s298
      %p300 = scmp.eq.s32.totalorder %s28, 0
      %p301 = por %p299, %p300
      %s302 = ssub.s32 %s30, %s37
      %p303 = scmp.eq.s32.totalorder %s302, 0
      %s305 = sadd.s32 %s304, 1
      %s306 = scalar_select %p303, %s304, %s305
      %p309 = pneg %p303
      %p310 = scmp.eq.s32.totalorder %s22, 3
      %p311 = por %p309, %p310
      %p312 = scmp.ne.s32.totalorder %s304, %s307
      %p313 = scmp.eq.s32.totalorder %s22, 0
      %p314 = por %p312, %p313
      %p315 = scmp.ne.s32.totalorder %s304, %s307
      %p316 = scmp.eq.s32.totalorder %s27, 3
      %p317 = por %p315, %p316
      %p318 = scmp.ne.s32.totalorder %s307, %s308
      %p319 = scmp.eq.s32.totalorder %s27, 0
      %p320 = por %p318, %p319
      %p321 = scmp.ne.s32.totalorder %s307, %s308
      %p322 = scmp.eq.s32.totalorder %s28, 3
      %p323 = por %p321, %p322
      %p325 = scmp.ne.s32.totalorder %s308, %s324
      %p326 = scmp.eq.s32.totalorder %s28, 0
      %p327 = por %p325, %p326
      %s328 = ssub.s32 %s30, %s37
      %p329 = scmp.eq.s32.totalorder %s328, 0
      %s331 = sadd.s32 %s330, 1
      %s332 = scalar_select %p329, %s330, %s331
      %p335 = pneg %p329
      %p336 = scmp.eq.s32.totalorder %s22, 3
      %p337 = por %p335, %p336
      %p338 = scmp.ne.s32.totalorder %s330, %s333
      %p339 = scmp.eq.s32.totalorder %s22, 0
      %p340 = por %p338, %p339
      %p341 = scmp.ne.s32.totalorder %s330, %s333
      %p342 = scmp.eq.s32.totalorder %s27, 3
      %p343 = por %p341, %p342
      %p344 = scmp.ne.s32.totalorder %s333, %s334
      %p345 = scmp.eq.s32.totalorder %s27, 0
      %p346 = por %p344, %p345
      %p347 = scmp.ne.s32.totalorder %s333, %s334
      %p348 = scmp.eq.s32.totalorder %s28, 3
      %p349 = por %p347, %p348
      %p351 = scmp.ne.s32.totalorder %s334, %s350
      %p352 = scmp.eq.s32.totalorder %s28, 0
      %p353 = por %p351, %p352
      %s354 = ssub.s32 %s29, %s41
      %p355 = scmp.eq.s32.totalorder %s354, 0
      %s357 = sadd.s32 %s356, 1
      %s358 = scalar_select %p355, %s356, %s357
      %p361 = pneg %p355
      %p362 = scmp.eq.s32.totalorder %s22, 3
      %p363 = por %p361, %p362
      %p364 = scmp.ne.s32.totalorder %s356, %s359
      %p365 = scmp.eq.s32.totalorder %s22, 0
      %p366 = por %p364, %p365
      %p367 = scmp.ne.s32.totalorder %s356, %s359
      %p368 = scmp.eq.s32.totalorder %s27, 3
      %p369 = por %p367, %p368
      %p370 = scmp.ne.s32.totalorder %s359, %s360
      %p371 = scmp.eq.s32.totalorder %s27, 0
      %p372 = por %p370, %p371
      %p373 = scmp.ne.s32.totalorder %s359, %s360
      %p374 = scmp.eq.s32.totalorder %s28, 3
      %p375 = por %p373, %p374
      %p377 = scmp.ne.s32.totalorder %s360, %s376
      %p378 = scmp.eq.s32.totalorder %s28, 0
      %p379 = por %p377, %p378
      %p380 = scmp.le.s32.totalorder 1, %s22
      %p381 = scmp.lt.s32.totalorder %s22, 5
      %p382 = pnand %p380, %p381
      %p383 = pneg %p382
      // Predicated region
      $region9: #{tpu_custom_call.1} parent=5 // pred_check
        _
      $region10: #{tpu_custom_call.1} parent=5 // pred_check_branch
        %385 = sbr.rel (%p382) target = $region12
      $region11: #{tpu_custom_call.1} parent=5 // pred_region
        %s386 = ssub.s32 %s22, 1
      $region12: #{tpu_custom_call.1} parent=5 // pred_fallthru
        _
      %p387 = scmp.lt.s32.totalorder %s22, 4
      // Predicated region
      $region13: #{tpu_custom_call.1} parent=5 // pred_check
        %p388 = pneg %p387
      $region14: #{tpu_custom_call.1} parent=5 // pred_check_branch
        %390 = sbr.rel (%p388) target = $region16
      $region15: #{tpu_custom_call.1} parent=5 // pred_region
        // Predicated region
        $region17: #{tpu_custom_call.1} parent=15 // pred_check
          %p391 = pneg %p54
        $region18: #{tpu_custom_call.1} parent=15 // pred_check_branch
          %393 = sbr.rel (%p391) target = $region20
        $region19: #{tpu_custom_call.1} parent=15 // pred_region
          %p394 = scmp.lt.s32.totalorder %s30, 1
          %s395 = scalar_select %p394, %s30, 1
          %s396 = smul.addr %s395, 4
          %s397 = smul.addr %s396, 4
          %s398 = scalar_lea.vmem %s1, %s397
        $region20: #{tpu_custom_call.1} parent=15 // pred_fallthru
          _
        // Predicated region
        $region21: #{tpu_custom_call.1} parent=15 // pred_check
          %p399 = pneg %p80
        $region22: #{tpu_custom_call.1} parent=15 // pred_check_branch
          %401 = sbr.rel (%p399) target = $region24
        $region23: #{tpu_custom_call.1} parent=15 // pred_region
          %p402 = scmp.lt.s32.totalorder %s30, 1
          %s403 = scalar_select %p402, %s30, 1
          %s404 = scalar_lea.vmem %s2, %s403
        $region24: #{tpu_custom_call.1} parent=15 // pred_fallthru
          _
        // Predicated region
        $region25: #{tpu_custom_call.1} parent=15 // pred_check
          %p405 = pneg %p106
        $region26: #{tpu_custom_call.1} parent=15 // pred_check_branch
          %407 = sbr.rel (%p405) target = $region28
        $region27: #{tpu_custom_call.1} parent=15 // pred_region
          %p408 = scmp.lt.s32.totalorder %s30, 1
          %s409 = scalar_select %p408, %s30, 1
          %s410 = smul.addr %s409, 4
          %s411 = smul.addr %s410, 4
          %s412 = scalar_lea.vmem %s3, %s411
        $region28: #{tpu_custom_call.1} parent=15 // pred_fallthru
          _
        // Predicated region
        $region29: #{tpu_custom_call.1} parent=15 // pred_check
          %p413 = pneg %p132
        $region30: #{tpu_custom_call.1} parent=15 // pred_check_branch
          %415 = sbr.rel (%p413) target = $region32
        $region31: #{tpu_custom_call.1} parent=15 // pred_region
          %p416 = scmp.lt.s32.totalorder %s30, 1
          %s417 = scalar_select %p416, %s30, 1
          %s418 = scalar_lea.vmem %s4, %s417
        $region32: #{tpu_custom_call.1} parent=15 // pred_fallthru
          _
        // Predicated region
        $region33: #{tpu_custom_call.1} parent=15 // pred_check
          %p419 = pneg %p158
        $region34: #{tpu_custom_call.1} parent=15 // pred_check_branch
          %421 = sbr.rel (%p419) target = $region36
        $region35: #{tpu_custom_call.1} parent=15 // pred_region
          %p422 = scmp.lt.s32.totalorder %s30, 1
          %s423 = scalar_select %p422, %s30, 1
          %s424 = smul.addr %s423, 4
          %s425 = smul.addr %s424, 4
          %s426 = scalar_lea.vmem %s5, %s425
        $region36: #{tpu_custom_call.1} parent=15 // pred_fallthru
          _
        // Predicated region
        $region37: #{tpu_custom_call.1} parent=15 // pred_check
          %p427 = pneg %p184
        $region38: #{tpu_custom_call.1} parent=15 // pred_check_branch
          %429 = sbr.rel (%p427) target = $region40
        $region39: #{tpu_custom_call.1} parent=15 // pred_region
          %p430 = scmp.lt.s32.totalorder %s30, 1
          %s431 = scalar_select %p430, %s30, 1
          %s432 = scalar_lea.vmem %s6, %s431
        $region40: #{tpu_custom_call.1} parent=15 // pred_fallthru
          _
        // Predicated region
        $region41: #{tpu_custom_call.1} parent=15 // pred_check
          %p433 = pneg %p210
        $region42: #{tpu_custom_call.1} parent=15 // pred_check_branch
          %435 = sbr.rel (%p433) target = $region44
        $region43: #{tpu_custom_call.1} parent=15 // pred_region
          %p436 = scmp.lt.s32.totalorder %s30, 1
          %s437 = scalar_select %p436, %s30, 1
          %s438 = smul.addr %s437, 8
          %s439 = smul.addr %s438, 4
          %s440 = scalar_lea.vmem %s7, %s439
        $region44: #{tpu_custom_call.1} parent=15 // pred_fallthru
          _
        // Predicated region
        $region45: #{tpu_custom_call.1} parent=15 // pred_check
          %p441 = pneg %p236
        $region46: #{tpu_custom_call.1} parent=15 // pred_check_branch
          %443 = sbr.rel (%p441) target = $region48
        $region47: #{tpu_custom_call.1} parent=15 // pred_region
          %p444 = scmp.lt.s32.totalorder %s30, 1
          %s445 = scalar_select %p444, %s30, 1
          %s446 = scalar_lea.vmem %s8, %s445
        $region48: #{tpu_custom_call.1} parent=15 // pred_fallthru
          _
        // Predicated region
        $region49: #{tpu_custom_call.1} parent=15 // pred_check
          %p447 = pneg %p262
        $region50: #{tpu_custom_call.1} parent=15 // pred_check_branch
          %449 = sbr.rel (%p447) target = $region52
        $region51: #{tpu_custom_call.1} parent=15 // pred_region
          %p450 = scmp.lt.s32.totalorder %s30, 1
          %s451 = scalar_select %p450, %s30, 1
          %s452 = scalar_lea.vmem %s9, %s451
        $region52: #{tpu_custom_call.1} parent=15 // pred_fallthru
          _
        // Predicated region
        $region53: #{tpu_custom_call.1} parent=15 // pred_check
          %p453 = pneg %p288
        $region54: #{tpu_custom_call.1} parent=15 // pred_check_branch
          %455 = sbr.rel (%p453) target = $region56
        $region55: #{tpu_custom_call.1} parent=15 // pred_region
          %p456 = scmp.lt.s32.totalorder %s30, 1
          %s457 = scalar_select %p456, %s30, 1
          %s458 = scalar_lea.vmem %s10, %s457
        $region56: #{tpu_custom_call.1} parent=15 // pred_fallthru
          _
        // Predicated region
        $region57: #{tpu_custom_call.1} parent=15 // pred_check
          %p459 = pneg %p314
        $region58: #{tpu_custom_call.1} parent=15 // pred_check_branch
          %461 = sbr.rel (%p459) target = $region60
        $region59: #{tpu_custom_call.1} parent=15 // pred_region
          %p462 = scmp.lt.s32.totalorder %s30, 1
          %s463 = scalar_select %p462, %s30, 1
          %s464 = scalar_lea.vmem %s11, %s463
        $region60: #{tpu_custom_call.1} parent=15 // pred_fallthru
          _
        // Predicated region
        $region61: #{tpu_custom_call.1} parent=15 // pred_check
          %p465 = pneg %p340
        $region62: #{tpu_custom_call.1} parent=15 // pred_check_branch
          %467 = sbr.rel (%p465) target = $region64
        $region63: #{tpu_custom_call.1} parent=15 // pred_region
          %p468 = scmp.lt.s32.totalorder %s30, 1
          %s469 = scalar_select %p468, %s30, 1
          %s470 = scalar_lea.vmem %s12, %s469
        $region64: #{tpu_custom_call.1} parent=15 // pred_fallthru
          _
      $region16: #{tpu_custom_call.1} parent=5 // pred_fallthru
        _
      %p471 = scmp.le.s32.totalorder 1, %s22
      %p472 = scmp.lt.s32.totalorder %s22, 5
      %p473 = pnand %p471, %p472
      %p474 = pneg %p473
      // Predicated region
      $region65: #{tpu_custom_call.1} parent=5 // pred_check
        _
      $region66: #{tpu_custom_call.1} parent=5 // pred_check_branch
        %476 = sbr.rel (%p473) target = $region68
      $region67: #{tpu_custom_call.1} parent=5 // pred_region
        %s477 = ssub.s32 %s22, 1
        %p478 = scmp.lt.s32.totalorder %s32, 1
        %s479 = scalar_select %p478, %s32, 1
        %s480 = smul.addr %s479, 4
        %s481 = smul.addr %s480, 4
        %s482 = scalar_lea.vmem %s1, %s481
        %p483 = pneg %p60
        %p484 = pneg %p57
        %p485 = scmp.lt.s32.totalorder %s32, 1
        %s486 = scalar_select %p485, %s32, 1
        %s487 = scalar_lea.vmem %s2, %s486
        %p488 = pneg %p86
        %p489 = pneg %p83
        %p490 = scmp.lt.s32.totalorder %s32, 1
        %s491 = scalar_select %p490, %s32, 1
        %s492 = smul.addr %s491, 4
        %s493 = smul.addr %s492, 4
        %s494 = scalar_lea.vmem %s3, %s493
        %p495 = pneg %p112
        %p496 = pneg %p109
        %p497 = scmp.lt.s32.totalorder %s32, 1
        %s498 = scalar_select %p497, %s32, 1
        %s499 = scalar_lea.vmem %s4, %s498
        %p500 = pneg %p138
        %p501 = pneg %p135
        %p502 = scmp.lt.s32.totalorder %s32, 1
        %s503 = scalar_select %p502, %s32, 1
        %s504 = smul.addr %s503, 4
        %s505 = smul.addr %s504, 4
        %s506 = scalar_lea.vmem %s5, %s505
        %p507 = pneg %p164
        %p508 = pneg %p161
        %p509 = scmp.lt.s32.totalorder %s32, 1
        %s510 = scalar_select %p509, %s32, 1
        %s511 = scalar_lea.vmem %s6, %s510
        %p512 = pneg %p190
        %p513 = pneg %p187
        %p514 = scmp.lt.s32.totalorder %s32, 1
        %s515 = scalar_select %p514, %s32, 1
        %s516 = smul.addr %s515, 8
        %s517 = smul.addr %s516, 4
        %s518 = scalar_lea.vmem %s7, %s517
        %p519 = pneg %p216
        %p520 = pneg %p213
        %p521 = scmp.lt.s32.totalorder %s32, 1
        %s522 = scalar_select %p521, %s32, 1
        %s523 = scalar_lea.vmem %s8, %s522
        %p524 = pneg %p242
        %p525 = pneg %p239
        %p526 = scmp.lt.s32.totalorder %s32, 1
        %s527 = scalar_select %p526, %s32, 1
        %s528 = scalar_lea.vmem %s9, %s527
        %p529 = pneg %p268
        %p530 = pneg %p265
        %p531 = scmp.lt.s32.totalorder %s32, 1
        %s532 = scalar_select %p531, %s32, 1
        %s533 = scalar_lea.vmem %s10, %s532
        %p534 = pneg %p294
        %p535 = pneg %p291
        %p536 = scmp.lt.s32.totalorder %s32, 1
        %s537 = scalar_select %p536, %s32, 1
        %s538 = scalar_lea.vmem %s11, %s537
        %p539 = pneg %p320
        %p540 = pneg %p317
        %p541 = scmp.lt.s32.totalorder %s32, 1
        %s542 = scalar_select %p541, %s32, 1
        %s543 = scalar_lea.vmem %s12, %s542
        %p544 = pneg %p346
        %p545 = pneg %p343
        %p546 = pneg %p372
        %p547 = pneg %p369
        %s548 = sand.u32 %s359, 1
        %s549 = scalar_lea.sflag [#allocation4], %s548
        %s550 = sand.u32 %s359, 1
        %s551 = smul.addr %s550, 8
        %s552 = scalar_lea.vmem [#allocation3], %s551
        %p553 = scmp.lt.s32.totalorder %s32, 1
        %s554 = scalar_select %p553, %s32, 1
        %s555 = smul.addr %s554, 4
        %s556 = smul.addr %s555, 4
        %s557 = scalar_lea.vmem %s1, %s556
        %p558 = scmp.lt.s32.totalorder %s32, 1
        %s559 = scalar_select %p558, %s32, 1
        %s560 = scalar_lea.vmem %s2, %s559
        %p561 = scmp.lt.s32.totalorder %s32, 1
        %s562 = scalar_select %p561, %s32, 1
        %s563 = smul.addr %s562, 4
        %s564 = smul.addr %s563, 4
        %s565 = scalar_lea.vmem %s3, %s564
        %p566 = scmp.lt.s32.totalorder %s32, 1
        %s567 = scalar_select %p566, %s32, 1
        %s568 = scalar_lea.vmem %s4, %s567
        %p569 = scmp.lt.s32.totalorder %s32, 1
        %s570 = scalar_select %p569, %s32, 1
        %s571 = smul.addr %s570, 4
        %s572 = smul.addr %s571, 4
        %s573 = scalar_lea.vmem %s5, %s572
        %p574 = scmp.lt.s32.totalorder %s32, 1
        %s575 = scalar_select %p574, %s32, 1
        %s576 = scalar_lea.vmem %s6, %s575
        %p577 = scmp.lt.s32.totalorder %s32, 1
        %s578 = scalar_select %p577, %s32, 1
        %s579 = smul.addr %s578, 8
        %s580 = smul.addr %s579, 4
        %s581 = scalar_lea.vmem %s7, %s580
        %p582 = scmp.lt.s32.totalorder %s32, 1
        %s583 = scalar_select %p582, %s32, 1
        %s584 = scalar_lea.vmem %s8, %s583
        %p585 = scmp.lt.s32.totalorder %s32, 1
        %s586 = scalar_select %p585, %s32, 1
        %s587 = scalar_lea.vmem %s9, %s586
        %p588 = scmp.lt.s32.totalorder %s32, 1
        %s589 = scalar_select %p588, %s32, 1
        %s590 = scalar_lea.vmem %s10, %s589
        %p591 = scmp.lt.s32.totalorder %s32, 1
        %s592 = scalar_select %p591, %s32, 1
        %s593 = scalar_lea.vmem %s11, %s592
        %p594 = scmp.lt.s32.totalorder %s32, 1
        %s595 = scalar_select %p594, %s32, 1
        %s596 = scalar_lea.vmem %s12, %s595
        %p598 = scmp.eq.s32.totalorder %s32, 0
        // Predicated region
        $region69: #{tpu_custom_call.1} parent=67 // pred_check
          %p599 = pneg %p598
        $region70: #{tpu_custom_call.1} parent=67 // pred_check_branch
          %601 = sbr.rel (%p599) target = $region72
        $region71: #{tpu_custom_call.1} parent=67 // pred_region
          %s602 = smul.u32 %s31, 8
          %s603 = smul.addr %s602, 16
          %s604 = scalar_lea.hbm %s0, %s603
          // Predicated region
          $region73: #{tpu_custom_call.1} parent=71 // pred_check
            _
          $region74: #{tpu_custom_call.1} parent=71 // pred_check_branch
            %606 = sbr.rel target = $region76
          $region75: #{tpu_custom_call.1} parent=71 // pred_region
            %607 = sst [smem:[#allocation7]] [#allocation6]
            %608 = sst [smem:[#allocation8]] [#allocation5]
          $region76: #{tpu_custom_call.1} parent=71 // pred_fallthru
            _
          %610 = shalt.err (0)
          %s612 = sshll.u32 %s552, 4
          %s613 = int_to_ptr.vmem [resolvable:$true] %s612
          %615 = dma.hbm_to_vmem [thread:$0]  %s604, 128, %s613, [#allocation2]
          %s616 = smul.u32 8, 1
          %s617 = sshll.u32 %s616, 4
          %618 = dma.done [#allocation2], %s617
        $region72: #{tpu_custom_call.1} parent=67 // pred_fallthru
          _
        %v619 = vld [vmem:[%s552] sm:$0xff]
        %v620 = vpack.c.bf16 %v619, %v619
        %v621 = vld [vmem:[%s557] sm:$0xf]
        %v622 = vld [vmem:[%s557 + $0x4] sm:$0xf]
        %v623 = vld [vmem:[%s557 + $0x8] sm:$0xf]
        %v624 = vld [vmem:[%s557 + $0xc] sm:$0xf]
        %v625 = vld [vmem:[%s560] sm:$0x1]
        %v627 = vlaneseq
        %v628 = vshrl.u32 %v627, 7
        %v629 = vsub.s32 0, %v628
        %v630 = vrot.slane %v625, %v629
        %v636 = vunpack.c.l.b16 %v621
        %v637 = vunpack.c.l.b16 %v622
        %v638 = vunpack.c.l.b16 %v623
        %v639 = vunpack.c.l.b16 %v624
        %v640 = vpack.c.b16 %v637, %v636
        %v641 = vpack.c.b16 %v639, %v638
        %vm644 = vcmask 261120
        %v646 = vsel %vm644, %v620, 0
        %648 = vmatprep.subr.bf16.mxu0 0
        %649 = vmatpush1.bf16.msra.mxu0 %v640
        %650 = vmatprep.subr.bf16.mxu0 0
        %651 = vmatpush1.bf16.msra.mxu0 %v641
        %652 = vmatprep.subr.bf16.mxu0 0
        %653 = vmatpush1.bf16.msra.mxu0 0
        %654 = vmatprep.subr.bf16.mxu0 0
        %655 = vmatpush1.bf16.msra.mxu0 0
        %656 = vmatprep.subr.bf16.mxu0 0
        %657 = vmatpush1.bf16.msra.mxu0 0
        %658 = vmatprep.subr.bf16.mxu0 0
        %659 = vmatpush1.bf16.msra.mxu0 0
        %660 = vmatprep.subr.bf16.mxu0 0
        %661 = vmatpush1.bf16.msra.mxu0 0
        %662 = vmatprep.subr.bf16.mxu0 0
        %663 = vmatpush1.bf16.msra.mxu0 0
        %664 = vmatprep.subr.bf16.mxu0 0
        %665 = vmatpush1.bf16.msra.mxu0 0
        %666 = vmatprep.subr.bf16.mxu0 0
        %667 = vmatpush1.bf16.msra.mxu0 0
        %668 = vmatprep.subr.bf16.mxu0 0
        %669 = vmatpush1.bf16.msra.mxu0 0
        %670 = vmatprep.subr.bf16.mxu0 0
        %671 = vmatpush1.bf16.msra.mxu0 0
        %672 = vmatprep.subr.bf16.mxu0 0
        %673 = vmatpush1.bf16.msra.mxu0 0
        %674 = vmatprep.subr.bf16.mxu0 0
        %675 = vmatpush1.bf16.msra.mxu0 0
        %676 = vmatprep.subr.bf16.mxu0 0
        %677 = vmatpush1.bf16.msra.mxu0 0
        %678 = vmatprep.subr.bf16.mxu0 0
        %679 = vmatpush1.bf16.msra.mxu0 0
        %680 = vmatprep.mubr.bf16.mxu0 0
        %681 = vmatmul.mubr.bf16.gmra.mrb[0].mxu0 %v646
        %v682 = vpop.f32.mrb[0].mxu0
        %v683 = vadd.f32 %v630, %v682
        %v684 = vpop.f32.mrb[0].mxu0
        %v685 = vpop.f32.mrb[0].mxu0
        %v686 = vpop.f32.mrb[0].mxu0
        %687 = vdwg.mxu0
        %v688 = vpack.c.bf16 %v683, %v683
        %690 = vrot.lane.b32.xlu0 %v688, 96
        %v691 = vpop.permute.xlu0 %690
        %v693 = vsel %vm644, %v688, 0
        %v696 = vsel %vm644, %v691, 0
        %698 = vmatprep.subr.bf16.mxu0 0
        %699 = vmatpush1.bf16.xpose.msra.mxu0 %v696
        %700 = vmatprep.subr.bf16.mxu0 0
        %701 = vmatpush1.bf16.xpose.msra.mxu0 0
        %702 = vmatprep.subr.bf16.mxu0 0
        %703 = vmatpush1.bf16.xpose.msra.mxu0 0
        %704 = vmatprep.subr.bf16.mxu0 0
        %705 = vmatpush1.bf16.xpose.msra.mxu0 0
        %706 = vmatprep.subr.bf16.mxu0 0
        %707 = vmatpush1.bf16.xpose.msra.mxu0 0
        %708 = vmatprep.subr.bf16.mxu0 0
        %709 = vmatpush1.bf16.xpose.msra.mxu0 0
        %710 = vmatprep.subr.bf16.mxu0 0
        %711 = vmatpush1.bf16.xpose.msra.mxu0 0
        %712 = vmatprep.subr.bf16.mxu0 0
        %713 = vmatpush1.bf16.xpose.msra.mxu0 0
        %714 = vmatprep.subr.bf16.mxu0 0
        %715 = vmatpush1.bf16.xpose.msra.mxu0 0
        %716 = vmatprep.subr.bf16.mxu0 0
        %717 = vmatpush1.bf16.xpose.msra.mxu0 0
        %718 = vmatprep.subr.bf16.mxu0 0
        %719 = vmatpush1.bf16.xpose.msra.mxu0 0
        %720 = vmatprep.subr.bf16.mxu0 0
        %721 = vmatpush1.bf16.xpose.msra.mxu0 0
        %722 = vmatprep.subr.bf16.mxu0 0
        %723 = vmatpush1.bf16.xpose.msra.mxu0 0
        %724 = vmatprep.subr.bf16.mxu0 0
        %725 = vmatpush1.bf16.xpose.msra.mxu0 0
        %726 = vmatprep.subr.bf16.mxu0 0
        %727 = vmatpush1.bf16.xpose.msra.mxu0 0
        %728 = vmatprep.subr.bf16.mxu0 0
        %729 = vmatpush1.bf16.xpose.msra.mxu0 0
        %730 = vmatprep.mubr.bf16.mxu0 0
        %731 = vmatmul.mubr.bf16.gmra.mrb[0].mxu0 %v693
        %v732 = vpop.f32.mrb[0].mxu0
        %v733 = vadd.f32 0.0, %v732
        %v734 = vpop.f32.mrb[0].mxu0
        %v735 = vpop.f32.mrb[0].mxu0
        %v736 = vpop.f32.mrb[0].mxu0
        %737 = vdwg.mxu0
        %vm738 = vcmask 64512
        %v739 = vsel %vm738, %v733, -inf
        %740 = vmax.xlane.f32.xlu0 %v739
        %v741 = vpop.xlane.xlu0 %740
        %v742 = vsub.f32 %v733, %v741
        %v743 = vmul.f32 %v742, 1.442695
        %v744 = vpow.pop %v743
        %v745 = vsel %vm738, %v744, 0.0
        %746 = vadd.xlane.f32.xlu0 %v745
        %v747 = vpop.xlane.xlu0 %746
        %v748 = vrcp.pop %v747
        %v749 = vmul.f32 %v744, %v748
        %v750 = vpack.c.bf16 %v749, %v749
        %751 = vrot.lane.b32.xlu0 %v688, 64
        %v752 = vpop.permute.xlu0 %751
        %v754 = vsel %vm738, %v750, 0
        %vm756 = vcmask 1043456
        %v758 = vsel %vm756, %v752, 0
        %760 = vmatprep.subr.bf16.mxu0 0
        %761 = vmatpush1.bf16.msra.mxu0 %v758
        %762 = vmatprep.subr.bf16.mxu0 0
        %763 = vmatpush1.bf16.msra.mxu0 0
        %764 = vmatprep.subr.bf16.mxu0 0
        %765 = vmatpush1.bf16.msra.mxu0 0
        %766 = vmatprep.subr.bf16.mxu0 0
        %767 = vmatpush1.bf16.msra.mxu0 0
        %768 = vmatprep.subr.bf16.mxu0 0
        %769 = vmatpush1.bf16.msra.mxu0 0
        %770 = vmatprep.subr.bf16.mxu0 0
        %771 = vmatpush1.bf16.msra.mxu0 0
        %772 = vmatprep.subr.bf16.mxu0 0
        %773 = vmatpush1.bf16.msra.mxu0 0
        %774 = vmatprep.subr.bf16.mxu0 0
        %775 = vmatpush1.bf16.msra.mxu0 0
        %776 = vmatprep.subr.bf16.mxu0 0
        %777 = vmatpush1.bf16.msra.mxu0 0
        %778 = vmatprep.subr.bf16.mxu0 0
        %779 = vmatpush1.bf16.msra.mxu0 0
        %780 = vmatprep.subr.bf16.mxu0 0
        %781 = vmatpush1.bf16.msra.mxu0 0
        %782 = vmatprep.subr.bf16.mxu0 0
        %783 = vmatpush1.bf16.msra.mxu0 0
        %784 = vmatprep.subr.bf16.mxu0 0
        %785 = vmatpush1.bf16.msra.mxu0 0
        %786 = vmatprep.subr.bf16.mxu0 0
        %787 = vmatpush1.bf16.msra.mxu0 0
        %788 = vmatprep.subr.bf16.mxu0 0
        %789 = vmatpush1.bf16.msra.mxu0 0
        %790 = vmatprep.subr.bf16.mxu0 0
        %791 = vmatpush1.bf16.msra.mxu0 0
        %792 = vmatprep.mubr.bf16.mxu0 0
        %793 = vmatmul.mubr.bf16.gmra.mrb[0].mxu0 %v754
        %v794 = vpop.f32.mrb[0].mxu0
        %v795 = vadd.f32 0.0, %v794
        %v796 = vpop.f32.mrb[0].mxu0
        %v797 = vpop.f32.mrb[0].mxu0
        %v798 = vpop.f32.mrb[0].mxu0
        %799 = vdwg.mxu0
        %v800 = vpack.c.bf16 %v795, %v795
        %v801 = vld [vmem:[%s565] sm:$0xf]
        %v802 = vld [vmem:[%s565 + $0x4] sm:$0xf]
        %v803 = vld [vmem:[%s565 + $0x8] sm:$0xf]
        %v804 = vld [vmem:[%s565 + $0xc] sm:$0xf]
        %v805 = vld [vmem:[%s568] sm:$0x1]
        %v807 = vlaneseq
        %v808 = vshrl.u32 %v807, 7
        %v809 = vsub.s32 0, %v808
        %v810 = vrot.slane %v805, %v809
        %v816 = vunpack.c.l.b16 %v801
        %v817 = vunpack.c.l.b16 %v802
        %v818 = vunpack.c.l.b16 %v803
        %v819 = vunpack.c.l.b16 %v804
        %v820 = vpack.c.b16 %v817, %v816
        %v821 = vpack.c.b16 %v819, %v818
        %v825 = vsel %vm644, %v800, 0
        %827 = vmatprep.subr.bf16.mxu0 0
        %828 = vmatpush1.bf16.msra.mxu0 %v820
        %829 = vmatprep.subr.bf16.mxu0 0
        %830 = vmatpush1.bf16.msra.mxu0 %v821
        %831 = vmatprep.subr.bf16.mxu0 0
        %832 = vmatpush1.bf16.msra.mxu0 0
        %833 = vmatprep.subr.bf16.mxu0 0
        %834 = vmatpush1.bf16.msra.mxu0 0
        %835 = vmatprep.subr.bf16.mxu0 0
        %836 = vmatpush1.bf16.msra.mxu0 0
        %837 = vmatprep.subr.bf16.mxu0 0
        %838 = vmatpush1.bf16.msra.mxu0 0
        %839 = vmatprep.subr.bf16.mxu0 0
        %840 = vmatpush1.bf16.msra.mxu0 0
        %841 = vmatprep.subr.bf16.mxu0 0
        %842 = vmatpush1.bf16.msra.mxu0 0
        %843 = vmatprep.subr.bf16.mxu0 0
        %844 = vmatpush1.bf16.msra.mxu0 0
        %845 = vmatprep.subr.bf16.mxu0 0
        %846 = vmatpush1.bf16.msra.mxu0 0
        %847 = vmatprep.subr.bf16.mxu0 0
        %848 = vmatpush1.bf16.msra.mxu0 0
        %849 = vmatprep.subr.bf16.mxu0 0
        %850 = vmatpush1.bf16.msra.mxu0 0
        %851 = vmatprep.subr.bf16.mxu0 0
        %852 = vmatpush1.bf16.msra.mxu0 0
        %853 = vmatprep.subr.bf16.mxu0 0
        %854 = vmatpush1.bf16.msra.mxu0 0
        %855 = vmatprep.subr.bf16.mxu0 0
        %856 = vmatpush1.bf16.msra.mxu0 0
        %857 = vmatprep.subr.bf16.mxu0 0
        %858 = vmatpush1.bf16.msra.mxu0 0
        %859 = vmatprep.mubr.bf16.mxu0 0
        %860 = vmatmul.mubr.bf16.gmra.mrb[0].mxu0 %v825
        %v861 = vpop.f32.mrb[0].mxu0
        %v862 = vadd.f32 %v810, %v861
        %v863 = vpop.f32.mrb[0].mxu0
        %v864 = vpop.f32.mrb[0].mxu0
        %v865 = vpop.f32.mrb[0].mxu0
        %866 = vdwg.mxu0
        %v867 = vadd.f32 %v619, %v862
        %v868 = vsel %vm644, %v867, 0.0
        %869 = vadd.xlane.f32.xlu0 %v868
        %v870 = vpop.xlane.xlu0 %869
        %v871 = vrcp.pop 32.0
        %v872 = vmul.f32 %v870, %v871
        %v873 = vmul.f32 %v867, %v867
        %v874 = vsel %vm644, %v873, 0.0
        %875 = vadd.xlane.f32.xlu0 %v874
        %v876 = vpop.xlane.xlu0 %875
        %v877 = vmul.f32 %v876, %v871
        %v878 = vmul.f32 %v872, %v872
        %v879 = vsub.f32 %v877, %v878
        %v880 = vmax.f32 %v879, 0.0
        %v881 = vsub.f32 %v867, %v872
        %v882 = vadd.f32 %v880, 1e-05
        %v883 = vrsqrt.pop %v882
        %v884 = vmul.f32 %v881, %v883
        %v885 = vld [vmem:[%s587] sm:$0x1]
        %v887 = vlaneseq
        %v888 = vshrl.u32 %v887, 7
        %v889 = vsub.s32 0, %v888
        %v890 = vrot.slane %v885, %v889
        %v892 = vmul.f32 %v884, %v890
        %v893 = vld [vmem:[%s590] sm:$0x1]
        %v895 = vlaneseq
        %v896 = vshrl.u32 %v895, 7
        %v897 = vsub.s32 0, %v896
        %v898 = vrot.slane %v893, %v897
        %v900 = vadd.f32 %v892, %v898
        %v901 = vpack.c.bf16 %v900, %v900
        %v902 = vld [vmem:[%s573] sm:$0xf]
        %v903 = vld [vmem:[%s573 + $0x4] sm:$0xf]
        %v904 = vld [vmem:[%s573 + $0x8] sm:$0xf]
        %v905 = vld [vmem:[%s573 + $0xc] sm:$0xf]
        %v906 = vld [vmem:[%s576] sm:$0x1]
        %v908 = vlaneseq
        %v909 = vshrl.u32 %v908, 7
        %v910 = vsub.s32 0, %v909
        %v911 = vrot.slane %v906, %v910
        %v917 = vunpack.c.l.b16 %v902
        %v918 = vunpack.c.l.b16 %v903
        %v919 = vunpack.c.l.b16 %v904
        %v920 = vunpack.c.l.b16 %v905
        %v921 = vpack.c.b16 %v918, %v917
        %v922 = vpack.c.b16 %v920, %v919
        %v926 = vsel %vm644, %v901, 0
        %928 = vmatprep.subr.bf16.mxu0 0
        %929 = vmatpush1.bf16.msra.mxu0 %v921
        %930 = vmatprep.subr.bf16.mxu0 0
        %931 = vmatpush1.bf16.msra.mxu0 %v922
        %932 = vmatprep.subr.bf16.mxu0 0
        %933 = vmatpush1.bf16.msra.mxu0 0
        %934 = vmatprep.subr.bf16.mxu0 0
        %935 = vmatpush1.bf16.msra.mxu0 0
        %936 = vmatprep.subr.bf16.mxu0 0
        %937 = vmatpush1.bf16.msra.mxu0 0
        %938 = vmatprep.subr.bf16.mxu0 0
        %939 = vmatpush1.bf16.msra.mxu0 0
        %940 = vmatprep.subr.bf16.mxu0 0
        %941 = vmatpush1.bf16.msra.mxu0 0
        %942 = vmatprep.subr.bf16.mxu0 0
        %943 = vmatpush1.bf16.msra.mxu0 0
        %944 = vmatprep.subr.bf16.mxu0 0
        %945 = vmatpush1.bf16.msra.mxu0 0
        %946 = vmatprep.subr.bf16.mxu0 0
        %947 = vmatpush1.bf16.msra.mxu0 0
        %948 = vmatprep.subr.bf16.mxu0 0
        %949 = vmatpush1.bf16.msra.mxu0 0
        %950 = vmatprep.subr.bf16.mxu0 0
        %951 = vmatpush1.bf16.msra.mxu0 0
        %952 = vmatprep.subr.bf16.mxu0 0
        %953 = vmatpush1.bf16.msra.mxu0 0
        %954 = vmatprep.subr.bf16.mxu0 0
        %955 = vmatpush1.bf16.msra.mxu0 0
        %956 = vmatprep.subr.bf16.mxu0 0
        %957 = vmatpush1.bf16.msra.mxu0 0
        %958 = vmatprep.subr.bf16.mxu0 0
        %959 = vmatpush1.bf16.msra.mxu0 0
        %960 = vmatprep.mubr.bf16.mxu0 0
        %961 = vmatmul.mubr.bf16.gmra.mrb[0].mxu0 %v926
        %v962 = vpop.f32.mrb[0].mxu0
        %v963 = vadd.f32 %v911, %v962
        %v964 = vpop.f32.mrb[0].mxu0
        %v965 = vpop.f32.mrb[0].mxu0
        %v966 = vpop.f32.mrb[0].mxu0
        %967 = vdwg.mxu0
        %v968 = vmax.f32 %v963, 0.0
        %v969 = vpack.c.bf16 %v968, %v968
        %v970 = vld [vmem:[%s581] sm:$0xf]
        %v971 = vld [vmem:[%s581 + $0x4] sm:$0xf]
        %v972 = vld [vmem:[%s581 + $0x8] sm:$0xf]
        %v973 = vld [vmem:[%s581 + $0xc] sm:$0xf]
        %v974 = vld [vmem:[%s581 + $0x10] sm:$0xf]
        %v975 = vld [vmem:[%s581 + $0x14] sm:$0xf]
        %v976 = vld [vmem:[%s581 + $0x18] sm:$0xf]
        %v977 = vld [vmem:[%s581 + $0x1c] sm:$0xf]
        %v978 = vld [vmem:[%s584] sm:$0x1]
        %v980 = vlaneseq
        %v981 = vshrl.u32 %v980, 7
        %v982 = vsub.s32 0, %v981
        %v983 = vrot.slane %v978, %v982
        %v993 = vunpack.c.l.b16 %v970
        %v994 = vunpack.c.l.b16 %v971
        %v995 = vunpack.c.l.b16 %v972
        %v996 = vunpack.c.l.b16 %v973
        %v997 = vunpack.c.l.b16 %v974
        %v998 = vunpack.c.l.b16 %v975
        %v999 = vunpack.c.l.b16 %v976
        %v1000 = vunpack.c.l.b16 %v977
        %v1001 = vpack.c.b16 %v994, %v993
        %v1002 = vpack.c.b16 %v996, %v995
        %v1003 = vpack.c.b16 %v998, %v997
        %v1004 = vpack.c.b16 %v1000, %v999
        %vm1009 = vcmask 523264
        %v1011 = vsel %vm1009, %v969, 0
        %1013 = vmatprep.subr.bf16.mxu0 0
        %1014 = vmatpush1.bf16.msra.mxu0 %v1001
        %1015 = vmatprep.subr.bf16.mxu0 0
        %1016 = vmatpush1.bf16.msra.mxu0 %v1002
        %1017 = vmatprep.subr.bf16.mxu0 0
        %1018 = vmatpush1.bf16.msra.mxu0 %v1003
        %1019 = vmatprep.subr.bf16.mxu0 0
        %1020 = vmatpush1.bf16.msra.mxu0 %v1004
        %1021 = vmatprep.subr.bf16.mxu0 0
        %1022 = vmatpush1.bf16.msra.mxu0 0
        %1023 = vmatprep.subr.bf16.mxu0 0
        %1024 = vmatpush1.bf16.msra.mxu0 0
        %1025 = vmatprep.subr.bf16.mxu0 0
        %1026 = vmatpush1.bf16.msra.mxu0 0
        %1027 = vmatprep.subr.bf16.mxu0 0
        %1028 = vmatpush1.bf16.msra.mxu0 0
        %1029 = vmatprep.subr.bf16.mxu0 0
        %1030 = vmatpush1.bf16.msra.mxu0 0
        %1031 = vmatprep.subr.bf16.mxu0 0
        %1032 = vmatpush1.bf16.msra.mxu0 0
        %1033 = vmatprep.subr.bf16.mxu0 0
        %1034 = vmatpush1.bf16.msra.mxu0 0
        %1035 = vmatprep.subr.bf16.mxu0 0
        %1036 = vmatpush1.bf16.msra.mxu0 0
        %1037 = vmatprep.subr.bf16.mxu0 0
        %1038 = vmatpush1.bf16.msra.mxu0 0
        %1039 = vmatprep.subr.bf16.mxu0 0
        %1040 = vmatpush1.bf16.msra.mxu0 0
        %1041 = vmatprep.subr.bf16.mxu0 0
        %1042 = vmatpush1.bf16.msra.mxu0 0
        %1043 = vmatprep.subr.bf16.mxu0 0
        %1044 = vmatpush1.bf16.msra.mxu0 0
        %1045 = vmatprep.mubr.bf16.mxu0 0
        %1046 = vmatmul.mubr.bf16.gmra.mrb[0].mxu0 %v1011
        %v1047 = vpop.f32.mrb[0].mxu0
        %v1048 = vadd.f32 %v983, %v1047
        %v1049 = vpop.f32.mrb[0].mxu0
        %v1050 = vpop.f32.mrb[0].mxu0
        %v1051 = vpop.f32.mrb[0].mxu0
        %1052 = vdwg.mxu0
        %v1053 = vadd.f32 %v900, %v1048
        %v1054 = vsel %vm644, %v1053, 0.0
        %1055 = vadd.xlane.f32.xlu0 %v1054
        %v1056 = vpop.xlane.xlu0 %1055
        %v1057 = vmul.f32 %v1056, %v871
        %v1058 = vmul.f32 %v1053, %v1053
        %v1059 = vsel %vm644, %v1058, 0.0
        %1060 = vadd.xlane.f32.xlu0 %v1059
        %v1061 = vpop.xlane.xlu0 %1060
        %v1062 = vmul.f32 %v1061, %v871
        %v1063 = vmul.f32 %v1057, %v1057
        %v1064 = vsub.f32 %v1062, %v1063
        %v1065 = vmax.f32 %v1064, 0.0
        %v1066 = vsub.f32 %v1053, %v1057
        %v1067 = vadd.f32 %v1065, 1e-05
        %v1068 = vrsqrt.pop %v1067
        %v1069 = vmul.f32 %v1066, %v1068
        %v1070 = vld [vmem:[%s593] sm:$0x1]
        %v1072 = vlaneseq
        %v1073 = vshrl.u32 %v1072, 7
        %v1074 = vsub.s32 0, %v1073
        %v1075 = vrot.slane %v1070, %v1074
        %v1077 = vmul.f32 %v1069, %v1075
        %v1078 = vld [vmem:[%s596] sm:$0x1]
        %v1080 = vlaneseq
        %v1081 = vshrl.u32 %v1080, 7
        %v1082 = vsub.s32 0, %v1081
        %v1083 = vrot.slane %v1078, %v1082
        %v1085 = vadd.f32 %v1077, %v1083
        %1086 = vst.msk [vmem:[%s552] sm:$0xff] %vm644, %v1085
        %s1087 = sand.u32 %s359, 1
        %s1088 = scalar_lea.sflag [#allocation4], %s1087
        %s1089 = sand.u32 %s359, 1
        %s1090 = smul.addr %s1089, 8
        %s1091 = scalar_lea.vmem [#allocation3], %s1090
        // Predicated region
        $region77: #{tpu_custom_call.1} parent=67 // pred_check
          %p1092 = pneg %p369
        $region78: #{tpu_custom_call.1} parent=67 // pred_check_branch
          %1094 = sbr.rel (%p1092) target = $region80
        $region79: #{tpu_custom_call.1} parent=67 // pred_region
          %s1096 = ssub.s32 128, 128
          %1097 = vsyncadd %s1088, %s1096
          %s1098 = smul.addr %s31, 128
          %s1099 = scalar_lea.hbm %s13, %s1098
          %s1101 = sshll.u32 %s1091, 4
          %s1102 = int_to_ptr.vmem [resolvable:$true] %s1101
          %1104 = dma.vmem_to_hbm [thread:$0]  %s1102, 128, %s1099, %s1088
        $region80: #{tpu_custom_call.1} parent=67 // pred_fallthru
          _
      $region68: #{tpu_custom_call.1} parent=5 // pred_fallthru
        _
      %p1105 = scmp.le.s32.totalorder 2, %s22
      // Predicated region
      $region81: #{tpu_custom_call.1} parent=5 // pred_check
        %p1106 = pneg %p1105
      $region82: #{tpu_custom_call.1} parent=5 // pred_check_branch
        %1108 = sbr.rel (%p1106) target = $region84
      $region83: #{tpu_custom_call.1} parent=5 // pred_region
        %s1109 = ssub.s32 %s22, 2
        // Predicated region
        $region85: #{tpu_custom_call.1} parent=83 // pred_check
          %p1110 = pneg %p375
        $region86: #{tpu_custom_call.1} parent=83 // pred_check_branch
          %1112 = sbr.rel (%p1110) target = $region88
        $region87: #{tpu_custom_call.1} parent=83 // pred_region
          %s1113 = sand.u32 %s360, 1
          %s1114 = scalar_lea.sflag [#allocation4], %s1113
          %s1115 = sand.u32 %s360, 1
          %s1116 = smul.addr %s1115, 8
          %s1117 = scalar_lea.vmem [#allocation3], %s1116
          %1118 = dma.done %s1114, 128
        $region88: #{tpu_custom_call.1} parent=83 // pred_fallthru
          _
      $region84: #{tpu_custom_call.1} parent=5 // pred_fallthru
        _
    $region6: #{tpu_custom_call.1} parent=1 // loop_footer
      %s26 = sadd.s32 1, %s22
    $region7: #{tpu_custom_call.1} parent=1 // loop_footer_branch
      %21 = sbr.rel target = $region3
    $region8: #{tpu_custom_call.1} parent=1 // loop_exit
      _
    %1119 = vsyncpa [#allocation4], 1
    %s1120 = scalar_lea.sflag [#allocation4], 1
    %1121 = vsyncpa %s1120, 1
  %1122 = vsyncmov [#allocation2]
  %s1123 = vpop.sfrf %1122
  %p1124 = scmp.eq.s32.totalorder %s1123, 0
  %p1125 = pneg %p1124
  %1127 = shalt.err (%p1125)

</llo_original>
